<compile_context>
chip_gen: v7x
topology: tpu7x:2x2x1
jax: 0.10.0
libtpu: 0.0.40
codegen_flags: <defaults>
</compile_context>

<pallas_src>
import jax
import jax.numpy as jnp
from jax.experimental import pallas as pl
from jax.experimental.pallas import tpu as pltpu

H = 4            # attention heads
C = 4            # h_dim (per-head out channels; concat=False -> mean over heads)
NEG_SLOPE = 0.2
BN_EPS = 1e-5
NEG_INF = -1e30


def gat_model_kernel(x_ref, adj_ref, mat_ref, vec_ref, out_ref):
    n = x_ref.shape[1]
    f_in = x_ref.shape[2]
    hc = H * C

    x = x_ref[0]          # [N, F_IN]
    adj = adj_ref[0]      # [N, N]
    mat = mat_ref[...]    # packed matrices   [f_in + 2*H*C + C, H*C]
    vec = vec_ref[...]    # packed row vecs   [8, H*C]

    r = 0
    w1 = mat[r:r + f_in, :]; r += f_in               # [F_IN, H*C]
    a1 = mat[r:r + hc, 0:2 * H]; r += hc             # [H*C, 2H] blockdiag (att_src | att_dst)
    a2 = mat[r:r + hc, 0:2 * H]; r += hc
    w2 = mat[r:r + C, :]                             # [C, H*C]  (bn1 scale folded in)

    b1 = vec[0:1, 0:C]        # [1, C]   gat1 bias
    c2 = vec[1:2, :]          # [1, H*C] bn1 shift pushed through gat2's transform
    wt = vec[2:3, 0:C]        # [1, C]   folded tail weight (bias2+bn2+linear1+bn3+linear2)
    bt = vec[3:4, 0:1]        # [1, 1]   folded tail bias

    # additive edge mask, shared by both layers, tiled per head on the lane axis
    neg = jnp.where(adj > 0.0, 0.0, NEG_INF)                      # [N, N]
    neg_b = jnp.tile(neg, (1, H))                                 # [N, H*N]

    def gat_layer(feat, w, a_bd, const_row):
        # fused per-head feature transform + attention scores
        xh = jnp.dot(feat, w, preferred_element_type=jnp.float32)         # [N, H*C]
        if const_row is not None:
            xh = xh + const_row
        sc = jnp.dot(xh, a_bd, preferred_element_type=jnp.float32)        # [N, 2H]
        s_src = sc[:, 0:H]                                                # [N, H]
        s_dst = sc[:, H:2 * H]                                            # [N, H]
        s_src_row = s_src.T                                               # [H, N] (one tiny xpose/layer)

        # e slab [N, H*N]: block h holds e_h[i, j] = s_dst[i, h] + s_src[j, h]
        s_dst_b = jnp.concatenate(
            [jnp.broadcast_to(s_dst[:, h:h + 1], (n, n)) for h in range(H)], axis=1)
        s_src_b = jnp.concatenate(
            [jnp.broadcast_to(s_src_row[h:h + 1, :], (n, n)) for h in range(H)], axis=1)
        e = s_dst_b + s_src_b
        e = jnp.where(e > 0.0, e, NEG_SLOPE * e)      # leaky_relu(0.2)
        e = e + neg_b                                 # mask non-edges (f32-safe)

        # per-head masked softmax: reductions per lane-block, exp/scale on the wide slab
        m_b = jnp.concatenate(
            [jnp.broadcast_to(jnp.max(e[:, h * n:(h + 1) * n], axis=-1, keepdims=True),
                              (n, n)) for h in range(H)], axis=1)
        p = jnp.exp(e - m_b)
        inv_b = jnp.concatenate(
            [jnp.broadcast_to(
                pl.reciprocal(jnp.sum(p[:, h * n:(h + 1) * n], axis=-1, keepdims=True),
                              approx=True), (n, n)) for h in range(H)], axis=1)
        p = p * inv_b                                                     # [N, H*N]

        # ONE K = H*N aggregation matmul, which also performs the head-sum
        xh_stack = jnp.concatenate(
            [xh[:, h * C:(h + 1) * C] for h in range(H)], axis=0)         # [H*N, C]
        return jnp.dot(p, xh_stack, preferred_element_type=jnp.float32) * (1.0 / H)

    # gat1 -> + bias -> relu          (bn1 folded into gat2's transform)
    h1 = jnp.maximum(gat_layer(x, w1, a1, None) + b1, 0.0)
    # gat2 (bn1-folded); bias2 + bn2 + linear1 + bn3 + linear2 folded into (wt, bt)
    h2 = gat_layer(h1, w2, a2, c2)

    # lane-dense [1, N] output row: out[j] = sum_c h2[j, c] * wt[c] + bt
    out_row = jnp.dot(wt, h2.T, preferred_element_type=jnp.float32) + bt   # [1, N]
    out_ref[...] = out_row[None]


def gat_model_forward(x, adj, packed_params):
    """x: [B, N, F_in] node features, adj: [B, N, N] dense adjacency (with self-loops)."""
    mat, vec = packed_params
    b, n, f_in = x.shape
    out = pl.pallas_call(
        gat_model_kernel,
        grid=(b,),
        out_shape=jax.ShapeDtypeStruct((b, 1, n), jnp.float32),
        in_specs=[
            pl.BlockSpec((1, n, f_in), lambda i: (i, 0, 0)),
            pl.BlockSpec((1, n, n), lambda i: (i, 0, 0)),
            pl.BlockSpec(mat.shape, lambda i: (0, 0)),   # params resident across grid
            pl.BlockSpec(vec.shape, lambda i: (0, 0)),
        ],
        out_specs=pl.BlockSpec((1, 1, n), lambda i: (i, 0, 0)),
        compiler_params=pltpu.CompilerParams(dimension_semantics=("parallel",)),
    )(x, adj, mat, vec)
    return out[:, 0, :]      # [B, N]  (matches torch `x.squeeze()` per graph)


# ----------------------- host-side folding / packing -----------------------

def _bn_fold(gamma, beta, mean, var):
    scale = gamma / jnp.sqrt(var + BN_EPS)
    shift = beta - mean * scale
    return scale.reshape(1, -1), shift.reshape(1, -1)


def _blockdiag_att(a_src, a_dst):
    """[H*C, 2H]: col h holds att_src[h] on its head's rows, col H+h holds att_dst[h]."""
    A = jnp.zeros((H * C, 2 * H), jnp.float32)
    for h in range(H):
        A = A.at[h * C:(h + 1) * C, h].set(a_src[h])
        A = A.at[h * C:(h + 1) * C, H + h].set(a_dst[h])
    return A


def pack_params(raw):
    (w1, as1, ad1, b1, bn1s, bn1b,
     w2, as2, ad2, b2, bn2s, bn2b,
     lw1, lb1, bn3s, bn3b,
     lw2, lb2) = raw
    hc = H * C
    a1 = _blockdiag_att(as1, ad1)
    a2 = _blockdiag_att(as2, ad2)

    # fold bn1 (post-relu scale/shift) into gat2's feature transform
    w2_f = bn1s.reshape(-1, 1) * w2                  # [C, H*C]
    c2 = bn1b.reshape(1, -1) @ w2                    # [1, H*C]

    # fold bias2 + bn2 + linear1 + bn3 + linear2 into a single row + scalar
    s2, t2 = bn2s.reshape(1, -1), bn2b.reshape(1, -1)
    s3, t3 = bn3s.reshape(1, -1), bn3b.reshape(1, -1)
    w_tail = (s2.reshape(-1, 1) * lw1 * s3) @ lw2    # [C, 1]
    b_tail = ((((b2.reshape(1, -1) * s2) + t2) @ lw1 + lb1) * s3 + t3) @ lw2 + lb2  # [1,1]

    def pad_w(a):
        return jnp.pad(a, ((0, 0), (0, hc - a.shape[1])))

    mat = jnp.concatenate([w1, pad_w(a1), pad_w(a2), w2_f], axis=0).astype(jnp.float32)
    vec = jnp.zeros((8, hc), jnp.float32)
    vec = vec.at[0, 0:C].set(b1.reshape(-1))
    vec = vec.at[1, :].set(c2.reshape(-1))
    vec = vec.at[2, 0:C].set(w_tail.reshape(-1))
    vec = vec.at[3, 0].set(b_tail.reshape(()))
    return mat, vec


# ----------------------- pure-JAX reference (unfused) -----------------------

def reference_forward(x, adj, raw):
    (w1, as1, ad1, b1, bn1s, bn1b,
     w2, as2, ad2, b2, bn2s, bn2b,
     lw1, lb1, bn3s, bn3b,
     lw2, lb2) = raw

    def gat(feat, w, a_s, a_d, bias):
        n = feat.shape[0]
        acc = jnp.zeros((n, C), jnp.float32)
        for h in range(H):
            xh = feat @ w[:, h * C:(h + 1) * C]
            ss = jnp.sum(xh * a_s[h], axis=-1, keepdims=True)
            sd = jnp.sum(xh * a_d[h], axis=-1, keepdims=True)
            e = sd + ss.T
            e = jnp.where(e > 0, e, NEG_SLOPE * e)
            e = jnp.where(adj > 0, e, -jnp.inf)
            acc = acc + jax.nn.softmax(e, axis=-1) @ xh
        return acc / H + bias

    h = jnp.maximum(gat(x, w1, as1, ad1, b1), 0.0)
    h = h * bn1s + bn1b
    h = gat(h, w2, as2, ad2, b2)
    h = h * bn2s + bn2b
    h = h @ lw1 + lb1
    h = h * bn3s + bn3b
    return (h @ lw2 + lb2)[:, 0]


if __name__ == "__main__":
    key = jax.random.PRNGKey(0)
    B, N, F_IN, E = 2, 16, 8, 40
    keys = iter(jax.random.split(key, 64))

    # ---- batch of graphs (dense adjacency, add_self_loops=True like PyG GATConv) ----
    xs, adjs = [], []
    for _ in range(B):
        xs.append(jax.random.normal(next(keys), (N, F_IN), dtype=jnp.float32))
        src = jax.random.randint(next(keys), (E,), 0, N)
        dst = jax.random.randint(next(keys), (E,), 0, N)
        a = jnp.zeros((N, N), jnp.float32).at[dst, src].set(1.0)
        a = a.at[jnp.arange(N), jnp.arange(N)].set(1.0)
        adjs.append(a)
    x = jnp.stack(xs)
    adj = jnp.stack(adjs)

    # ---- deterministic parameters ----
    def normal(shape, scale=0.3):
        return scale * jax.random.normal(next(keys), shape, dtype=jnp.float32)

    def bn_params():
        return _bn_fold(normal((C,), 1.0) + 1.0, normal((C,)), normal((C,)),
                        jax.random.uniform(next(keys), (C,), minval=0.5, maxval=1.5))

    w1 = normal((F_IN, H * C)); as1 = normal((H, C)); ad1 = normal((H, C)); b1 = normal((1, C))
    bn1s, bn1b = bn_params()
    w2 = normal((C, H * C)); as2 = normal((H, C)); ad2 = normal((H, C)); b2 = normal((1, C))
    bn2s, bn2b = bn_params()
    lw1 = normal((C, C)); lb1 = normal((1, C))
    bn3s, bn3b = bn_params()
    lw2 = normal((C, 1)); lb2 = normal((1, 1))

    raw = (w1, as1, ad1, b1, bn1s, bn1b,
           w2, as2, ad2, b2, bn2s, bn2b,
           lw1, lb1, bn3s, bn3b,
           lw2, lb2)
    packed = pack_params(raw)

    out = gat_model_forward(x, adj, packed)
    jax.block_until_ready(out)

    ref = jnp.stack([reference_forward(x[i], adj[i], raw) for i in range(B)])
    assert out.shape == (B, N)
    assert bool(jnp.all(jnp.isfinite(out)))
    err = float(jnp.max(jnp.abs(out - ref)))
    assert err < 2e-2, f"max abs error {err}"
    print("KERNEL_OK")
</pallas_src>

<mosaic_0001>
module attributes {stable_mosaic.version = 11 : i64} {
  func.func @gat_model_kernel(%arg0: i32, %arg1: memref<1x16x8xf32, #tpu.memory_space<vmem>>, %arg2: memref<1x16x16xf32, #tpu.memory_space<vmem>>, %arg3: memref<44x16xf32, #tpu.memory_space<vmem>>, %arg4: memref<8x16xf32, #tpu.memory_space<vmem>>, %arg5: memref<1x1x16xf32, #tpu.memory_space<vmem>>) attributes {dimension_semantics = [#tpu.dimension_semantics<parallel>], iteration_bounds = array<i64: 2>, scalar_prefetch = 0 : i64, scratch_operands = 0 : i64, tpu.core_type = #tpu.core_type<tc>, window_params = [{transform_indices = @transform_0, window_bounds = array<i64: 1, 16, 8>}, {transform_indices = @transform_1, window_bounds = array<i64: 1, 16, 16>}, {pipeline_mode = #tpu.pipeline_mode<synchronous>, transform_indices = @transform_2, window_bounds = array<i64: 44, 16>}, {pipeline_mode = #tpu.pipeline_mode<synchronous>, transform_indices = @transform_3, window_bounds = array<i64: 8, 16>}, {transform_indices = @transform_4, window_bounds = array<i64: 1, 1, 16>}]} {
    %c0 = arith.constant 0 : index
    %c0_0 = arith.constant 0 : index
    %c0_1 = arith.constant 0 : index
    %0 = vector.load %arg1[%c0, %c0_0, %c0_1] : memref<1x16x8xf32, #tpu.memory_space<vmem>>, vector<1x16x8xf32>
    %1 = vector.shape_cast %0 : vector<1x16x8xf32> to vector<16x8xf32>
    %c0_2 = arith.constant 0 : index
    %c0_3 = arith.constant 0 : index
    %c0_4 = arith.constant 0 : index
    %2 = vector.load %arg2[%c0_2, %c0_3, %c0_4] : memref<1x16x16xf32, #tpu.memory_space<vmem>>, vector<1x16x16xf32>
    %3 = vector.shape_cast %2 : vector<1x16x16xf32> to vector<16x16xf32>
    %c0_5 = arith.constant 0 : index
    %c0_6 = arith.constant 0 : index
    %4 = vector.load %arg3[%c0_5, %c0_6] : memref<44x16xf32, #tpu.memory_space<vmem>>, vector<44x16xf32>
    %c0_7 = arith.constant 0 : index
    %c0_8 = arith.constant 0 : index
    %5 = vector.load %arg4[%c0_7, %c0_8] : memref<8x16xf32, #tpu.memory_space<vmem>>, vector<8x16xf32>
    %6 = vector.extract_strided_slice %4 {offsets = [0, 0], sizes = [8, 16], strides = [1, 1]} : vector<44x16xf32> to vector<8x16xf32>
    %7 = vector.extract_strided_slice %4 {offsets = [8, 0], sizes = [16, 8], strides = [1, 1]} : vector<44x16xf32> to vector<16x8xf32>
    %8 = vector.extract_strided_slice %4 {offsets = [24, 0], sizes = [16, 8], strides = [1, 1]} : vector<44x16xf32> to vector<16x8xf32>
    %9 = vector.extract_strided_slice %4 {offsets = [40, 0], sizes = [4, 16], strides = [1, 1]} : vector<44x16xf32> to vector<4x16xf32>
    %10 = vector.extract_strided_slice %5 {offsets = [0, 0], sizes = [1, 4], strides = [1, 1]} : vector<8x16xf32> to vector<1x4xf32>
    %11 = vector.extract_strided_slice %5 {offsets = [1, 0], sizes = [1, 16], strides = [1, 1]} : vector<8x16xf32> to vector<1x16xf32>
    %12 = vector.extract_strided_slice %5 {offsets = [2, 0], sizes = [1, 4], strides = [1, 1]} : vector<8x16xf32> to vector<1x4xf32>
    %13 = vector.extract_strided_slice %5 {offsets = [3, 0], sizes = [1, 1], strides = [1, 1]} : vector<8x16xf32> to vector<1x1xf32>
    %cst = arith.constant 0.000000e+00 : f32
    %14 = vector.broadcast %cst : f32 to vector<16x16xf32>
    %15 = arith.cmpf ogt, %3, %14 : vector<16x16xf32>
    %cst_9 = arith.constant 0.000000e+00 : f32
    %cst_10 = arith.constant -1.000000e+30 : f32
    %16 = vector.broadcast %cst_9 : f32 to vector<16x16xf32>
    %17 = vector.broadcast %cst_10 : f32 to vector<16x16xf32>
    %18 = arith.select %15, %16, %17 : vector<16x16xi1>, vector<16x16xf32>
    %19 = tpu.concatenate %18, %18, %18, %18 in 1 : vector<16x16xf32>, vector<16x16xf32>, vector<16x16xf32>, vector<16x16xf32> -> vector<16x64xf32>
    %cst_11 = arith.constant dense<0.000000e+00> : vector<16x16xf32>
    %20 = tpu.matmul %1, %6, %cst_11 {dimension_numbers = #tpu.dot_dimension_numbers<[1], [0], [0], [1], [0, 0, 1, 1], [], []>} : vector<16x8xf32>, vector<8x16xf32>, vector<16x16xf32> -> vector<16x16xf32>
    %cst_12 = arith.constant dense<0.000000e+00> : vector<16x8xf32>
    %21 = tpu.matmul %20, %7, %cst_12 {dimension_numbers = #tpu.dot_dimension_numbers<[1], [0], [0], [1], [0, 0, 1, 1], [], []>} : vector<16x16xf32>, vector<16x8xf32>, vector<16x8xf32> -> vector<16x8xf32>
    %22 = vector.extract_strided_slice %21 {offsets = [0, 0], sizes = [16, 4], strides = [1, 1]} : vector<16x8xf32> to vector<16x4xf32>
    %23 = vector.extract_strided_slice %21 {offsets = [0, 4], sizes = [16, 4], strides = [1, 1]} : vector<16x8xf32> to vector<16x4xf32>
    %24 = tpu.transpose %22, [1, 0] : vector<16x4xf32> -> vector<4x16xf32>
    %25 = vector.extract_strided_slice %23 {offsets = [0, 0], sizes = [16, 1], strides = [1, 1]} : vector<16x4xf32> to vector<16x1xf32>
    %26 = vector.shape_cast %25 : vector<16x1xf32> to vector<16x1xf32>
    %27 = vector.broadcast %26 : vector<16x1xf32> to vector<16x16xf32>
    %28 = vector.extract_strided_slice %23 {offsets = [0, 1], sizes = [16, 1], strides = [1, 1]} : vector<16x4xf32> to vector<16x1xf32>
    %29 = vector.shape_cast %28 : vector<16x1xf32> to vector<16x1xf32>
    %30 = vector.broadcast %29 : vector<16x1xf32> to vector<16x16xf32>
    %31 = vector.extract_strided_slice %23 {offsets = [0, 2], sizes = [16, 1], strides = [1, 1]} : vector<16x4xf32> to vector<16x1xf32>
    %32 = vector.shape_cast %31 : vector<16x1xf32> to vector<16x1xf32>
    %33 = vector.broadcast %32 : vector<16x1xf32> to vector<16x16xf32>
    %34 = vector.extract_strided_slice %23 {offsets = [0, 3], sizes = [16, 1], strides = [1, 1]} : vector<16x4xf32> to vector<16x1xf32>
    %35 = vector.shape_cast %34 : vector<16x1xf32> to vector<16x1xf32>
    %36 = vector.broadcast %35 : vector<16x1xf32> to vector<16x16xf32>
    %37 = tpu.concatenate %27, %30, %33, %36 in 1 : vector<16x16xf32>, vector<16x16xf32>, vector<16x16xf32>, vector<16x16xf32> -> vector<16x64xf32>
    %38 = vector.extract_strided_slice %24 {offsets = [0, 0], sizes = [1, 16], strides = [1, 1]} : vector<4x16xf32> to vector<1x16xf32>
    %39 = vector.shape_cast %38 : vector<1x16xf32> to vector<1x16xf32>
    %40 = vector.broadcast %39 : vector<1x16xf32> to vector<16x16xf32>
    %41 = vector.extract_strided_slice %24 {offsets = [1, 0], sizes = [1, 16], strides = [1, 1]} : vector<4x16xf32> to vector<1x16xf32>
    %42 = vector.shape_cast %41 : vector<1x16xf32> to vector<1x16xf32>
    %43 = vector.broadcast %42 : vector<1x16xf32> to vector<16x16xf32>
    %44 = vector.extract_strided_slice %24 {offsets = [2, 0], sizes = [1, 16], strides = [1, 1]} : vector<4x16xf32> to vector<1x16xf32>
    %45 = vector.shape_cast %44 : vector<1x16xf32> to vector<1x16xf32>
    %46 = vector.broadcast %45 : vector<1x16xf32> to vector<16x16xf32>
    %47 = vector.extract_strided_slice %24 {offsets = [3, 0], sizes = [1, 16], strides = [1, 1]} : vector<4x16xf32> to vector<1x16xf32>
    %48 = vector.shape_cast %47 : vector<1x16xf32> to vector<1x16xf32>
    %49 = vector.broadcast %48 : vector<1x16xf32> to vector<16x16xf32>
    %50 = tpu.concatenate %40, %43, %46, %49 in 1 : vector<16x16xf32>, vector<16x16xf32>, vector<16x16xf32>, vector<16x16xf32> -> vector<16x64xf32>
    %51 = arith.addf %37, %50 : vector<16x64xf32>
    %cst_13 = arith.constant 0.000000e+00 : f32
    %52 = vector.broadcast %cst_13 : f32 to vector<16x64xf32>
    %53 = arith.cmpf ogt, %51, %52 : vector<16x64xf32>
    %cst_14 = arith.constant 2.000000e-01 : f32
    %54 = vector.broadcast %cst_14 : f32 to vector<16x64xf32>
    %55 = arith.mulf %54, %51 : vector<16x64xf32>
    %56 = arith.select %53, %51, %55 : vector<16x64xi1>, vector<16x64xf32>
    %57 = arith.addf %56, %19 : vector<16x64xf32>
    %58 = vector.extract_strided_slice %57 {offsets = [0, 0], sizes = [16, 16], strides = [1, 1]} : vector<16x64xf32> to vector<16x16xf32>
    %cst_15 = arith.constant dense<0xFF800000> : vector<16xf32>
    %59 = vector.multi_reduction <maximumf>, %58, %cst_15 [1] : vector<16x16xf32> to vector<16xf32>
    %60 = vector.shape_cast %59 : vector<16xf32> to vector<16x1xf32>
    %61 = vector.shape_cast %60 : vector<16x1xf32> to vector<16x1xf32>
    %62 = vector.broadcast %61 : vector<16x1xf32> to vector<16x16xf32>
    %63 = vector.extract_strided_slice %57 {offsets = [0, 16], sizes = [16, 16], strides = [1, 1]} : vector<16x64xf32> to vector<16x16xf32>
    %cst_16 = arith.constant dense<0xFF800000> : vector<16xf32>
    %64 = vector.multi_reduction <maximumf>, %63, %cst_16 [1] : vector<16x16xf32> to vector<16xf32>
    %65 = vector.shape_cast %64 : vector<16xf32> to vector<16x1xf32>
    %66 = vector.shape_cast %65 : vector<16x1xf32> to vector<16x1xf32>
    %67 = vector.broadcast %66 : vector<16x1xf32> to vector<16x16xf32>
    %68 = vector.extract_strided_slice %57 {offsets = [0, 32], sizes = [16, 16], strides = [1, 1]} : vector<16x64xf32> to vector<16x16xf32>
    %cst_17 = arith.constant dense<0xFF800000> : vector<16xf32>
    %69 = vector.multi_reduction <maximumf>, %68, %cst_17 [1] : vector<16x16xf32> to vector<16xf32>
    %70 = vector.shape_cast %69 : vector<16xf32> to vector<16x1xf32>
    %71 = vector.shape_cast %70 : vector<16x1xf32> to vector<16x1xf32>
    %72 = vector.broadcast %71 : vector<16x1xf32> to vector<16x16xf32>
    %73 = vector.extract_strided_slice %57 {offsets = [0, 48], sizes = [16, 16], strides = [1, 1]} : vector<16x64xf32> to vector<16x16xf32>
    %cst_18 = arith.constant dense<0xFF800000> : vector<16xf32>
    %74 = vector.multi_reduction <maximumf>, %73, %cst_18 [1] : vector<16x16xf32> to vector<16xf32>
    %75 = vector.shape_cast %74 : vector<16xf32> to vector<16x1xf32>
    %76 = vector.shape_cast %75 : vector<16x1xf32> to vector<16x1xf32>
    %77 = vector.broadcast %76 : vector<16x1xf32> to vector<16x16xf32>
    %78 = tpu.concatenate %62, %67, %72, %77 in 1 : vector<16x16xf32>, vector<16x16xf32>, vector<16x16xf32>, vector<16x16xf32> -> vector<16x64xf32>
    %79 = arith.subf %57, %78 : vector<16x64xf32>
    %80 = math.exp %79 : vector<16x64xf32>
    %81 = vector.extract_strided_slice %80 {offsets = [0, 0], sizes = [16, 16], strides = [1, 1]} : vector<16x64xf32> to vector<16x16xf32>
    %cst_19 = arith.constant dense<0.000000e+00> : vector<16xf32>
    %82 = vector.multi_reduction <add>, %81, %cst_19 [1] : vector<16x16xf32> to vector<16xf32>
    %83 = vector.shape_cast %82 : vector<16xf32> to vector<16x1xf32>
    %84 = tpu.reciprocal %83 {approx = true} : vector<16x1xf32> -> vector<16x1xf32>
    %85 = vector.shape_cast %84 : vector<16x1xf32> to vector<16x1xf32>
    %86 = vector.broadcast %85 : vector<16x1xf32> to vector<16x16xf32>
    %87 = vector.extract_strided_slice %80 {offsets = [0, 16], sizes = [16, 16], strides = [1, 1]} : vector<16x64xf32> to vector<16x16xf32>
    %cst_20 = arith.constant dense<0.000000e+00> : vector<16xf32>
    %88 = vector.multi_reduction <add>, %87, %cst_20 [1] : vector<16x16xf32> to vector<16xf32>
    %89 = vector.shape_cast %88 : vector<16xf32> to vector<16x1xf32>
    %90 = tpu.reciprocal %89 {approx = true} : vector<16x1xf32> -> vector<16x1xf32>
    %91 = vector.shape_cast %90 : vector<16x1xf32> to vector<16x1xf32>
    %92 = vector.broadcast %91 : vector<16x1xf32> to vector<16x16xf32>
    %93 = vector.extract_strided_slice %80 {offsets = [0, 32], sizes = [16, 16], strides = [1, 1]} : vector<16x64xf32> to vector<16x16xf32>
    %cst_21 = arith.constant dense<0.000000e+00> : vector<16xf32>
    %94 = vector.multi_reduction <add>, %93, %cst_21 [1] : vector<16x16xf32> to vector<16xf32>
    %95 = vector.shape_cast %94 : vector<16xf32> to vector<16x1xf32>
    %96 = tpu.reciprocal %95 {approx = true} : vector<16x1xf32> -> vector<16x1xf32>
    %97 = vector.shape_cast %96 : vector<16x1xf32> to vector<16x1xf32>
    %98 = vector.broadcast %97 : vector<16x1xf32> to vector<16x16xf32>
    %99 = vector.extract_strided_slice %80 {offsets = [0, 48], sizes = [16, 16], strides = [1, 1]} : vector<16x64xf32> to vector<16x16xf32>
    %cst_22 = arith.constant dense<0.000000e+00> : vector<16xf32>
    %100 = vector.multi_reduction <add>, %99, %cst_22 [1] : vector<16x16xf32> to vector<16xf32>
    %101 = vector.shape_cast %100 : vector<16xf32> to vector<16x1xf32>
    %102 = tpu.reciprocal %101 {approx = true} : vector<16x1xf32> -> vector<16x1xf32>
    %103 = vector.shape_cast %102 : vector<16x1xf32> to vector<16x1xf32>
    %104 = vector.broadcast %103 : vector<16x1xf32> to vector<16x16xf32>
    %105 = tpu.concatenate %86, %92, %98, %104 in 1 : vector<16x16xf32>, vector<16x16xf32>, vector<16x16xf32>, vector<16x16xf32> -> vector<16x64xf32>
    %106 = arith.mulf %80, %105 : vector<16x64xf32>
    %107 = vector.extract_strided_slice %20 {offsets = [0, 0], sizes = [16, 4], strides = [1, 1]} : vector<16x16xf32> to vector<16x4xf32>
    %108 = vector.extract_strided_slice %20 {offsets = [0, 4], sizes = [16, 4], strides = [1, 1]} : vector<16x16xf32> to vector<16x4xf32>
    %109 = vector.extract_strided_slice %20 {offsets = [0, 8], sizes = [16, 4], strides = [1, 1]} : vector<16x16xf32> to vector<16x4xf32>
    %110 = vector.extract_strided_slice %20 {offsets = [0, 12], sizes = [16, 4], strides = [1, 1]} : vector<16x16xf32> to vector<16x4xf32>
    %111 = tpu.concatenate %107, %108, %109, %110 in 0 : vector<16x4xf32>, vector<16x4xf32>, vector<16x4xf32>, vector<16x4xf32> -> vector<64x4xf32>
    %cst_23 = arith.constant dense<0.000000e+00> : vector<16x4xf32>
    %112 = tpu.matmul %106, %111, %cst_23 {dimension_numbers = #tpu.dot_dimension_numbers<[1], [0], [0], [1], [0, 0, 1, 1], [], []>} : vector<16x64xf32>, vector<64x4xf32>, vector<16x4xf32> -> vector<16x4xf32>
    %cst_24 = arith.constant 2.500000e-01 : f32
    %113 = vector.broadcast %cst_24 : f32 to vector<16x4xf32>
    %114 = arith.mulf %112, %113 : vector<16x4xf32>
    %115 = vector.broadcast %10 : vector<1x4xf32> to vector<16x4xf32>
    %116 = arith.addf %114, %115 : vector<16x4xf32>
    %cst_25 = arith.constant 0.000000e+00 : f32
    %117 = vector.broadcast %cst_25 : f32 to vector<16x4xf32>
    %118 = arith.maximumf %116, %117 : vector<16x4xf32>
    %cst_26 = arith.constant dense<0.000000e+00> : vector<16x16xf32>
    %119 = tpu.matmul %118, %9, %cst_26 {dimension_numbers = #tpu.dot_dimension_numbers<[1], [0], [0], [1], [0, 0, 1, 1], [], []>} : vector<16x4xf32>, vector<4x16xf32>, vector<16x16xf32> -> vector<16x16xf32>
    %120 = vector.broadcast %11 : vector<1x16xf32> to vector<16x16xf32>
    %121 = arith.addf %119, %120 : vector<16x16xf32>
    %cst_27 = arith.constant dense<0.000000e+00> : vector<16x8xf32>
    %122 = tpu.matmul %121, %8, %cst_27 {dimension_numbers = #tpu.dot_dimension_numbers<[1], [0], [0], [1], [0, 0, 1, 1], [], []>} : vector<16x16xf32>, vector<16x8xf32>, vector<16x8xf32> -> vector<16x8xf32>
    %123 = vector.extract_strided_slice %122 {offsets = [0, 0], sizes = [16, 4], strides = [1, 1]} : vector<16x8xf32> to vector<16x4xf32>
    %124 = vector.extract_strided_slice %122 {offsets = [0, 4], sizes = [16, 4], strides = [1, 1]} : vector<16x8xf32> to vector<16x4xf32>
    %125 = tpu.transpose %123, [1, 0] : vector<16x4xf32> -> vector<4x16xf32>
    %126 = vector.extract_strided_slice %124 {offsets = [0, 0], sizes = [16, 1], strides = [1, 1]} : vector<16x4xf32> to vector<16x1xf32>
    %127 = vector.shape_cast %126 : vector<16x1xf32> to vector<16x1xf32>
    %128 = vector.broadcast %127 : vector<16x1xf32> to vector<16x16xf32>
    %129 = vector.extract_strided_slice %124 {offsets = [0, 1], sizes = [16, 1], strides = [1, 1]} : vector<16x4xf32> to vector<16x1xf32>
    %130 = vector.shape_cast %129 : vector<16x1xf32> to vector<16x1xf32>
    %131 = vector.broadcast %130 : vector<16x1xf32> to vector<16x16xf32>
    %132 = vector.extract_strided_slice %124 {offsets = [0, 2], sizes = [16, 1], strides = [1, 1]} : vector<16x4xf32> to vector<16x1xf32>
    %133 = vector.shape_cast %132 : vector<16x1xf32> to vector<16x1xf32>
    %134 = vector.broadcast %133 : vector<16x1xf32> to vector<16x16xf32>
    %135 = vector.extract_strided_slice %124 {offsets = [0, 3], sizes = [16, 1], strides = [1, 1]} : vector<16x4xf32> to vector<16x1xf32>
    %136 = vector.shape_cast %135 : vector<16x1xf32> to vector<16x1xf32>
    %137 = vector.broadcast %136 : vector<16x1xf32> to vector<16x16xf32>
    %138 = tpu.concatenate %128, %131, %134, %137 in 1 : vector<16x16xf32>, vector<16x16xf32>, vector<16x16xf32>, vector<16x16xf32> -> vector<16x64xf32>
    %139 = vector.extract_strided_slice %125 {offsets = [0, 0], sizes = [1, 16], strides = [1, 1]} : vector<4x16xf32> to vector<1x16xf32>
    %140 = vector.shape_cast %139 : vector<1x16xf32> to vector<1x16xf32>
    %141 = vector.broadcast %140 : vector<1x16xf32> to vector<16x16xf32>
    %142 = vector.extract_strided_slice %125 {offsets = [1, 0], sizes = [1, 16], strides = [1, 1]} : vector<4x16xf32> to vector<1x16xf32>
    %143 = vector.shape_cast %142 : vector<1x16xf32> to vector<1x16xf32>
    %144 = vector.broadcast %143 : vector<1x16xf32> to vector<16x16xf32>
    %145 = vector.extract_strided_slice %125 {offsets = [2, 0], sizes = [1, 16], strides = [1, 1]} : vector<4x16xf32> to vector<1x16xf32>
    %146 = vector.shape_cast %145 : vector<1x16xf32> to vector<1x16xf32>
    %147 = vector.broadcast %146 : vector<1x16xf32> to vector<16x16xf32>
    %148 = vector.extract_strided_slice %125 {offsets = [3, 0], sizes = [1, 16], strides = [1, 1]} : vector<4x16xf32> to vector<1x16xf32>
    %149 = vector.shape_cast %148 : vector<1x16xf32> to vector<1x16xf32>
    %150 = vector.broadcast %149 : vector<1x16xf32> to vector<16x16xf32>
    %151 = tpu.concatenate %141, %144, %147, %150 in 1 : vector<16x16xf32>, vector<16x16xf32>, vector<16x16xf32>, vector<16x16xf32> -> vector<16x64xf32>
    %152 = arith.addf %138, %151 : vector<16x64xf32>
    %cst_28 = arith.constant 0.000000e+00 : f32
    %153 = vector.broadcast %cst_28 : f32 to vector<16x64xf32>
    %154 = arith.cmpf ogt, %152, %153 : vector<16x64xf32>
    %cst_29 = arith.constant 2.000000e-01 : f32
    %155 = vector.broadcast %cst_29 : f32 to vector<16x64xf32>
    %156 = arith.mulf %155, %152 : vector<16x64xf32>
    %157 = arith.select %154, %152, %156 : vector<16x64xi1>, vector<16x64xf32>
    %158 = arith.addf %157, %19 : vector<16x64xf32>
    %159 = vector.extract_strided_slice %158 {offsets = [0, 0], sizes = [16, 16], strides = [1, 1]} : vector<16x64xf32> to vector<16x16xf32>
    %cst_30 = arith.constant dense<0xFF800000> : vector<16xf32>
    %160 = vector.multi_reduction <maximumf>, %159, %cst_30 [1] : vector<16x16xf32> to vector<16xf32>
    %161 = vector.shape_cast %160 : vector<16xf32> to vector<16x1xf32>
    %162 = vector.shape_cast %161 : vector<16x1xf32> to vector<16x1xf32>
    %163 = vector.broadcast %162 : vector<16x1xf32> to vector<16x16xf32>
    %164 = vector.extract_strided_slice %158 {offsets = [0, 16], sizes = [16, 16], strides = [1, 1]} : vector<16x64xf32> to vector<16x16xf32>
    %cst_31 = arith.constant dense<0xFF800000> : vector<16xf32>
    %165 = vector.multi_reduction <maximumf>, %164, %cst_31 [1] : vector<16x16xf32> to vector<16xf32>
    %166 = vector.shape_cast %165 : vector<16xf32> to vector<16x1xf32>
    %167 = vector.shape_cast %166 : vector<16x1xf32> to vector<16x1xf32>
    %168 = vector.broadcast %167 : vector<16x1xf32> to vector<16x16xf32>
    %169 = vector.extract_strided_slice %158 {offsets = [0, 32], sizes = [16, 16], strides = [1, 1]} : vector<16x64xf32> to vector<16x16xf32>
    %cst_32 = arith.constant dense<0xFF800000> : vector<16xf32>
    %170 = vector.multi_reduction <maximumf>, %169, %cst_32 [1] : vector<16x16xf32> to vector<16xf32>
    %171 = vector.shape_cast %170 : vector<16xf32> to vector<16x1xf32>
    %172 = vector.shape_cast %171 : vector<16x1xf32> to vector<16x1xf32>
    %173 = vector.broadcast %172 : vector<16x1xf32> to vector<16x16xf32>
    %174 = vector.extract_strided_slice %158 {offsets = [0, 48], sizes = [16, 16], strides = [1, 1]} : vector<16x64xf32> to vector<16x16xf32>
    %cst_33 = arith.constant dense<0xFF800000> : vector<16xf32>
    %175 = vector.multi_reduction <maximumf>, %174, %cst_33 [1] : vector<16x16xf32> to vector<16xf32>
    %176 = vector.shape_cast %175 : vector<16xf32> to vector<16x1xf32>
    %177 = vector.shape_cast %176 : vector<16x1xf32> to vector<16x1xf32>
    %178 = vector.broadcast %177 : vector<16x1xf32> to vector<16x16xf32>
    %179 = tpu.concatenate %163, %168, %173, %178 in 1 : vector<16x16xf32>, vector<16x16xf32>, vector<16x16xf32>, vector<16x16xf32> -> vector<16x64xf32>
    %180 = arith.subf %158, %179 : vector<16x64xf32>
    %181 = math.exp %180 : vector<16x64xf32>
    %182 = vector.extract_strided_slice %181 {offsets = [0, 0], sizes = [16, 16], strides = [1, 1]} : vector<16x64xf32> to vector<16x16xf32>
    %cst_34 = arith.constant dense<0.000000e+00> : vector<16xf32>
    %183 = vector.multi_reduction <add>, %182, %cst_34 [1] : vector<16x16xf32> to vector<16xf32>
    %184 = vector.shape_cast %183 : vector<16xf32> to vector<16x1xf32>
    %185 = tpu.reciprocal %184 {approx = true} : vector<16x1xf32> -> vector<16x1xf32>
    %186 = vector.shape_cast %185 : vector<16x1xf32> to vector<16x1xf32>
    %187 = vector.broadcast %186 : vector<16x1xf32> to vector<16x16xf32>
    %188 = vector.extract_strided_slice %181 {offsets = [0, 16], sizes = [16, 16], strides = [1, 1]} : vector<16x64xf32> to vector<16x16xf32>
    %cst_35 = arith.constant dense<0.000000e+00> : vector<16xf32>
    %189 = vector.multi_reduction <add>, %188, %cst_35 [1] : vector<16x16xf32> to vector<16xf32>
    %190 = vector.shape_cast %189 : vector<16xf32> to vector<16x1xf32>
    %191 = tpu.reciprocal %190 {approx = true} : vector<16x1xf32> -> vector<16x1xf32>
    %192 = vector.shape_cast %191 : vector<16x1xf32> to vector<16x1xf32>
    %193 = vector.broadcast %192 : vector<16x1xf32> to vector<16x16xf32>
    %194 = vector.extract_strided_slice %181 {offsets = [0, 32], sizes = [16, 16], strides = [1, 1]} : vector<16x64xf32> to vector<16x16xf32>
    %cst_36 = arith.constant dense<0.000000e+00> : vector<16xf32>
    %195 = vector.multi_reduction <add>, %194, %cst_36 [1] : vector<16x16xf32> to vector<16xf32>
    %196 = vector.shape_cast %195 : vector<16xf32> to vector<16x1xf32>
    %197 = tpu.reciprocal %196 {approx = true} : vector<16x1xf32> -> vector<16x1xf32>
    %198 = vector.shape_cast %197 : vector<16x1xf32> to vector<16x1xf32>
    %199 = vector.broadcast %198 : vector<16x1xf32> to vector<16x16xf32>
    %200 = vector.extract_strided_slice %181 {offsets = [0, 48], sizes = [16, 16], strides = [1, 1]} : vector<16x64xf32> to vector<16x16xf32>
    %cst_37 = arith.constant dense<0.000000e+00> : vector<16xf32>
    %201 = vector.multi_reduction <add>, %200, %cst_37 [1] : vector<16x16xf32> to vector<16xf32>
    %202 = vector.shape_cast %201 : vector<16xf32> to vector<16x1xf32>
    %203 = tpu.reciprocal %202 {approx = true} : vector<16x1xf32> -> vector<16x1xf32>
    %204 = vector.shape_cast %203 : vector<16x1xf32> to vector<16x1xf32>
    %205 = vector.broadcast %204 : vector<16x1xf32> to vector<16x16xf32>
    %206 = tpu.concatenate %187, %193, %199, %205 in 1 : vector<16x16xf32>, vector<16x16xf32>, vector<16x16xf32>, vector<16x16xf32> -> vector<16x64xf32>
    %207 = arith.mulf %181, %206 : vector<16x64xf32>
    %208 = vector.extract_strided_slice %121 {offsets = [0, 0], sizes = [16, 4], strides = [1, 1]} : vector<16x16xf32> to vector<16x4xf32>
    %209 = vector.extract_strided_slice %121 {offsets = [0, 4], sizes = [16, 4], strides = [1, 1]} : vector<16x16xf32> to vector<16x4xf32>
    %210 = vector.extract_strided_slice %121 {offsets = [0, 8], sizes = [16, 4], strides = [1, 1]} : vector<16x16xf32> to vector<16x4xf32>
    %211 = vector.extract_strided_slice %121 {offsets = [0, 12], sizes = [16, 4], strides = [1, 1]} : vector<16x16xf32> to vector<16x4xf32>
    %212 = tpu.concatenate %208, %209, %210, %211 in 0 : vector<16x4xf32>, vector<16x4xf32>, vector<16x4xf32>, vector<16x4xf32> -> vector<64x4xf32>
    %cst_38 = arith.constant dense<0.000000e+00> : vector<16x4xf32>
    %213 = tpu.matmul %207, %212, %cst_38 {dimension_numbers = #tpu.dot_dimension_numbers<[1], [0], [0], [1], [0, 0, 1, 1], [], []>} : vector<16x64xf32>, vector<64x4xf32>, vector<16x4xf32> -> vector<16x4xf32>
    %cst_39 = arith.constant 2.500000e-01 : f32
    %214 = vector.broadcast %cst_39 : f32 to vector<16x4xf32>
    %215 = arith.mulf %213, %214 : vector<16x4xf32>
    %216 = tpu.transpose %215, [1, 0] : vector<16x4xf32> -> vector<4x16xf32>
    %cst_40 = arith.constant dense<0.000000e+00> : vector<1x16xf32>
    %217 = tpu.matmul %12, %216, %cst_40 {dimension_numbers = #tpu.dot_dimension_numbers<[1], [0], [0], [1], [0, 0, 1, 1], [], []>} : vector<1x4xf32>, vector<4x16xf32>, vector<1x16xf32> -> vector<1x16xf32>
    %218 = vector.broadcast %13 : vector<1x1xf32> to vector<1x16xf32>
    %219 = arith.addf %217, %218 : vector<1x16xf32>
    %220 = vector.shape_cast %219 : vector<1x16xf32> to vector<1x1x16xf32>
    %c0_41 = arith.constant 0 : index
    %c0_42 = arith.constant 0 : index
    %c0_43 = arith.constant 0 : index
    %221 = vector.load %arg5[%c0_41, %c0_42, %c0_43] : memref<1x1x16xf32, #tpu.memory_space<vmem>>, vector<1x1x16xf32>
    tpu.vector_store %arg5[%c0_41, %c0_42, %c0_43], %220 {strides = array<i32>} : memref<1x1x16xf32, #tpu.memory_space<vmem>>, vector<1x1x16xf32>,
    return
  }
  func.func @transform_0(%arg0: i32) -> (i32, i32, i32) {
    %c0_i32 = arith.constant 0 : i32
    %c0_i32_0 = arith.constant 0 : i32
    %c0_i32_1 = arith.constant 0 : i32
    return %arg0, %c0_i32, %c0_i32_0 : i32, i32, i32
  }
  func.func @transform_1(%arg0: i32) -> (i32, i32, i32) {
    %c0_i32 = arith.constant 0 : i32
    %c0_i32_0 = arith.constant 0 : i32
    %c0_i32_1 = arith.constant 0 : i32
    return %arg0, %c0_i32, %c0_i32_0 : i32, i32, i32
  }
  func.func @transform_2(%arg0: i32) -> (i32, i32) {
    %c0_i32 = arith.constant 0 : i32
    %c0_i32_0 = arith.constant 0 : i32
    %c0_i32_1 = arith.constant 0 : i32
    return %c0_i32, %c0_i32_0 : i32, i32
  }
  func.func @transform_3(%arg0: i32) -> (i32, i32) {
    %c0_i32 = arith.constant 0 : i32
    %c0_i32_0 = arith.constant 0 : i32
    %c0_i32_1 = arith.constant 0 : i32
    return %c0_i32, %c0_i32_0 : i32, i32
  }
  func.func @transform_4(%arg0: i32) -> (i32, i32, i32) {
    %c0_i32 = arith.constant 0 : i32
    %c0_i32_0 = arith.constant 0 : i32
    %c0_i32_1 = arith.constant 0 : i32
    return %arg0, %c0_i32, %c0_i32_0 : i32, i32, i32
  }
}

</mosaic_0001>

<llo_original>
// kernel: tpu_custom_call.1
$region0: #{tpu_custom_call.1}
  #allocation0 [shape = 'u32[]', space=smem, size = 0x4, offset = 0x4, fixed_abs, tag = 'smem constant byte address 0x4 - core index']
  #allocation1 [shape = 'u32[144,128]{1,0:T(1,128)}', space=vmem, size = 0x12000, scoped, tag = 'internal scratch']
  %s0 = inlined_call_operand.vmem [shape: f32[2,16,8], index: 0, kind: input, shape index: {}]
  %s1 = inlined_call_operand.vmem [shape: f32[2,16,16], index: 1, kind: input, shape index: {}]
  %s2 = inlined_call_operand.vmem [shape: f32[44,16], index: 2, kind: input, shape index: {}]
  %s3 = inlined_call_operand.vmem [shape: f32[8,16], index: 3, kind: input, shape index: {}]
  %s4 = inlined_call_operand.hbm [shape: f32[2,1,16], index: 4, kind: output, shape index: {}]
  %s5 = sld [smem:[#allocation0]]
  $region49: #{tpu_custom_call.1} parent=0
    _
  %s7 = ssub.s32 1, %s5
  %s8 = scalar_select 0, %s7, %s5
  $region1: #{tpu_custom_call.1} parent=0
    #allocation2 [shape = 'u8[1024]{0}', space=vmem, size = 0x400, scoped, tag = 'output window, operand 0']
    #allocation3 [shape = 's32[2]{0}', space=sflag, size = 0x8, scoped, tag = 'scoped memory for tpu_custom_call.1']
    %9 = vsyncpa [#allocation3], 0
    %s10 = scalar_lea.sflag [#allocation3], 1
    %11 = vsyncpa %s10, 0
    loop: start=0, step=1, limit=4
    $region2: #{tpu_custom_call.1} parent=1 // loop_pre_header
      _
    $region3: #{tpu_custom_call.1} parent=1 // loop_header
      %s13 = sphi 0, %s17
      %p14 = scmp.ge.s32.totalorder %s13, 4
      %s23 = sphi 0, %s25
      %s26 = sphi 0, %s23
      %s27 = sphi 0, %s26
      %s43 = sphi 0, %s27
      %s49 = sphi 0, %s51
      %s52 = sphi 0, %s49
      %s53 = sphi 0, %s52
      %s69 = sphi 0, %s53
      %s73 = sphi 0, %s73
      %s75 = sphi 0, %s73
      %s76 = sphi 0, %s75
      %s90 = sphi 0, %s76
      %s94 = sphi 0, %s94
      %s96 = sphi 0, %s94
      %s97 = sphi 0, %s96
      %s111 = sphi 0, %s97
      %s117 = sphi 0, %s119
      %s120 = sphi 0, %s117
      %s121 = sphi 0, %s120
      %s137 = sphi 0, %s121
    $region4: #{tpu_custom_call.1} parent=1 // loop_header_branch
      %16 = sbr.rel (%p14) target = $region8
    $region5: #{tpu_custom_call.1} parent=1 // loop_body
      %s18 = ssub.s32 %s13, 1
      %s19 = ssub.s32 %s13, 2
      %s20 = sadd.s32 %s13, 1
      %s21 = ssub.s32 %s13, %s20
      %p22 = scmp.eq.s32.totalorder %s21, 0
      %s24 = sadd.s32 %s23, 1
      %s25 = scalar_select %p22, %s23, %s24
      %p28 = pneg %p22
      %p29 = scmp.eq.s32.totalorder %s13, 1
      %p30 = por %p28, %p29
      %p31 = scmp.ne.s32.totalorder %s23, %s26
      %p32 = scmp.eq.s32.totalorder %s13, 0
      %p33 = por %p31, %p32
      %p34 = scmp.ne.s32.totalorder %s23, %s26
      %p35 = scmp.eq.s32.totalorder %s18, 1
      %p36 = por %p34, %p35
      %p37 = scmp.ne.s32.totalorder %s26, %s27
      %p38 = scmp.eq.s32.totalorder %s18, 0
      %p39 = por %p37, %p38
      %p40 = scmp.ne.s32.totalorder %s26, %s27
      %p41 = scmp.eq.s32.totalorder %s19, 1
      %p42 = por %p40, %p41
      %p44 = scmp.ne.s32.totalorder %s27, %s43
      %p45 = scmp.eq.s32.totalorder %s19, 0
      %p46 = por %p44, %p45
      %s47 = ssub.s32 %s13, %s20
      %p48 = scmp.eq.s32.totalorder %s47, 0
      %s50 = sadd.s32 %s49, 1
      %s51 = scalar_select %p48, %s49, %s50
      %p54 = pneg %p48
      %p55 = scmp.eq.s32.totalorder %s13, 1
      %p56 = por %p54, %p55
      %p57 = scmp.ne.s32.totalorder %s49, %s52
      %p58 = scmp.eq.s32.totalorder %s13, 0
      %p59 = por %p57, %p58
      %p60 = scmp.ne.s32.totalorder %s49, %s52
      %p61 = scmp.eq.s32.totalorder %s18, 1
      %p62 = por %p60, %p61
      %p63 = scmp.ne.s32.totalorder %s52, %s53
      %p64 = scmp.eq.s32.totalorder %s18, 0
      %p65 = por %p63, %p64
      %p66 = scmp.ne.s32.totalorder %s52, %s53
      %p67 = scmp.eq.s32.totalorder %s19, 1
      %p68 = por %p66, %p67
      %p70 = scmp.ne.s32.totalorder %s53, %s69
      %p71 = scmp.eq.s32.totalorder %s19, 0
      %p72 = por %p70, %p71
      %s74 = sadd.s32 %s73, 1
      %p77 = scmp.eq.s32.totalorder %s13, 1
      %p78 = scmp.ne.s32.totalorder %s73, %s75
      %p79 = scmp.eq.s32.totalorder %s13, 0
      %p80 = por %p78, %p79
      %p81 = scmp.ne.s32.totalorder %s73, %s75
      %p82 = scmp.eq.s32.totalorder %s18, 1
      %p83 = por %p81, %p82
      %p84 = scmp.ne.s32.totalorder %s75, %s76
      %p85 = scmp.eq.s32.totalorder %s18, 0
      %p86 = por %p84, %p85
      %p87 = scmp.ne.s32.totalorder %s75, %s76
      %p88 = scmp.eq.s32.totalorder %s19, 1
      %p89 = por %p87, %p88
      %p91 = scmp.ne.s32.totalorder %s76, %s90
      %p92 = scmp.eq.s32.totalorder %s19, 0
      %p93 = por %p91, %p92
      %s95 = sadd.s32 %s94, 1
      %p98 = scmp.eq.s32.totalorder %s13, 1
      %p99 = scmp.ne.s32.totalorder %s94, %s96
      %p100 = scmp.eq.s32.totalorder %s13, 0
      %p101 = por %p99, %p100
      %p102 = scmp.ne.s32.totalorder %s94, %s96
      %p103 = scmp.eq.s32.totalorder %s18, 1
      %p104 = por %p102, %p103
      %p105 = scmp.ne.s32.totalorder %s96, %s97
      %p106 = scmp.eq.s32.totalorder %s18, 0
      %p107 = por %p105, %p106
      %p108 = scmp.ne.s32.totalorder %s96, %s97
      %p109 = scmp.eq.s32.totalorder %s19, 1
      %p110 = por %p108, %p109
      %p112 = scmp.ne.s32.totalorder %s97, %s111
      %p113 = scmp.eq.s32.totalorder %s19, 0
      %p114 = por %p112, %p113
      %s115 = ssub.s32 %s13, %s20
      %p116 = scmp.eq.s32.totalorder %s115, 0
      %s118 = sadd.s32 %s117, 1
      %s119 = scalar_select %p116, %s117, %s118
      %p122 = pneg %p116
      %p123 = scmp.eq.s32.totalorder %s13, 1
      %p124 = por %p122, %p123
      %p125 = scmp.ne.s32.totalorder %s117, %s120
      %p126 = scmp.eq.s32.totalorder %s13, 0
      %p127 = por %p125, %p126
      %p128 = scmp.ne.s32.totalorder %s117, %s120
      %p129 = scmp.eq.s32.totalorder %s18, 1
      %p130 = por %p128, %p129
      %p131 = scmp.ne.s32.totalorder %s120, %s121
      %p132 = scmp.eq.s32.totalorder %s18, 0
      %p133 = por %p131, %p132
      %p134 = scmp.ne.s32.totalorder %s120, %s121
      %p135 = scmp.eq.s32.totalorder %s19, 1
      %p136 = por %p134, %p135
      %p138 = scmp.ne.s32.totalorder %s121, %s137
      %p139 = scmp.eq.s32.totalorder %s19, 0
      %p140 = por %p138, %p139
      %p141 = scmp.le.s32.totalorder 1, %s13
      %p142 = scmp.lt.s32.totalorder %s13, 3
      %p143 = pnand %p141, %p142
      %p144 = pneg %p143
      // Predicated region
      $region9: #{tpu_custom_call.1} parent=5 // pred_check
        _
      $region10: #{tpu_custom_call.1} parent=5 // pred_check_branch
        %146 = sbr.rel (%p143) target = $region12
      $region11: #{tpu_custom_call.1} parent=5 // pred_region
        %s147 = ssub.s32 %s13, 1
        // Predicated region
        $region13: #{tpu_custom_call.1} parent=11 // pred_check
          %p148 = pneg %p86
        $region14: #{tpu_custom_call.1} parent=11 // pred_check_branch
          %150 = sbr.rel (%p148) target = $region16
        $region15: #{tpu_custom_call.1} parent=11 // pred_region
          _
        $region16: #{tpu_custom_call.1} parent=11 // pred_fallthru
          _
        // Predicated region
        $region17: #{tpu_custom_call.1} parent=11 // pred_check
          %p151 = pneg %p107
        $region18: #{tpu_custom_call.1} parent=11 // pred_check_branch
          %153 = sbr.rel (%p151) target = $region20
        $region19: #{tpu_custom_call.1} parent=11 // pred_region
          _
        $region20: #{tpu_custom_call.1} parent=11 // pred_fallthru
          _
      $region12: #{tpu_custom_call.1} parent=5 // pred_fallthru
        _
      %p154 = scmp.lt.s32.totalorder %s13, 2
      // Predicated region
      $region21: #{tpu_custom_call.1} parent=5 // pred_check
        %p155 = pneg %p154
      $region22: #{tpu_custom_call.1} parent=5 // pred_check_branch
        %157 = sbr.rel (%p155) target = $region24
      $region23: #{tpu_custom_call.1} parent=5 // pred_region
        // Predicated region
        $region25: #{tpu_custom_call.1} parent=23 // pred_check
          %p158 = pneg %p33
        $region26: #{tpu_custom_call.1} parent=23 // pred_check_branch
          %160 = sbr.rel (%p158) target = $region28
        $region27: #{tpu_custom_call.1} parent=23 // pred_region
          %p161 = scmp.lt.s32.totalorder %s13, 1
          %s162 = scalar_select %p161, %s13, 1
          %s163 = smul.addr %s162, 2
          %s164 = smul.addr %s163, 8
          %s165 = scalar_lea.vmem %s0, %s164
        $region28: #{tpu_custom_call.1} parent=23 // pred_fallthru
          _
        // Predicated region
        $region29: #{tpu_custom_call.1} parent=23 // pred_check
          %p166 = pneg %p59
        $region30: #{tpu_custom_call.1} parent=23 // pred_check_branch
          %168 = sbr.rel (%p166) target = $region32
        $region31: #{tpu_custom_call.1} parent=23 // pred_region
          %p169 = scmp.lt.s32.totalorder %s13, 1
          %s170 = scalar_select %p169, %s13, 1
          %s171 = smul.addr %s170, 2
          %s172 = smul.addr %s171, 8
          %s173 = scalar_lea.vmem %s1, %s172
        $region32: #{tpu_custom_call.1} parent=23 // pred_fallthru
          _
      $region24: #{tpu_custom_call.1} parent=5 // pred_fallthru
        _
      %p174 = scmp.le.s32.totalorder 1, %s13
      %p175 = scmp.lt.s32.totalorder %s13, 3
      %p176 = pnand %p174, %p175
      %p177 = pneg %p176
      // Predicated region
      $region33: #{tpu_custom_call.1} parent=5 // pred_check
        _
      $region34: #{tpu_custom_call.1} parent=5 // pred_check_branch
        %179 = sbr.rel (%p176) target = $region36
      $region35: #{tpu_custom_call.1} parent=5 // pred_region
        %s180 = ssub.s32 %s13, 1
        %p181 = scmp.lt.s32.totalorder %s18, 1
        %s182 = scalar_select %p181, %s18, 1
        %s183 = smul.addr %s182, 2
        %s184 = smul.addr %s183, 8
        %s185 = scalar_lea.vmem %s0, %s184
        %p186 = pneg %p39
        %p187 = pneg %p36
        %p188 = scmp.lt.s32.totalorder %s18, 1
        %s189 = scalar_select %p188, %s18, 1
        %s190 = smul.addr %s189, 2
        %s191 = smul.addr %s190, 8
        %s192 = scalar_lea.vmem %s1, %s191
        %p193 = pneg %p65
        %p194 = pneg %p62
        %p195 = pneg %p86
        %p196 = pneg %p83
        %p197 = pneg %p107
        %p198 = pneg %p104
        %p199 = pneg %p133
        %p200 = pneg %p130
        %s201 = sand.u32 %s120, 1
        %s202 = scalar_lea.sflag [#allocation3], %s201
        %s203 = sand.u32 %s120, 1
        %s204 = scalar_lea.vmem [#allocation2], %s203
        %p205 = scmp.lt.s32.totalorder %s18, 1
        %s206 = scalar_select %p205, %s18, 1
        %s207 = smul.addr %s206, 2
        %s208 = smul.addr %s207, 8
        %s209 = scalar_lea.vmem %s0, %s208
        %p210 = scmp.lt.s32.totalorder %s18, 1
        %s211 = scalar_select %p210, %s18, 1
        %s212 = smul.addr %s211, 2
        %s213 = smul.addr %s212, 8
        %s214 = scalar_lea.vmem %s1, %s213
        %v215 = vld [vmem:[%s209] sm:$0xff]
        %v216 = vld [vmem:[%s209 + $0x8] sm:$0xff]
        %v217 = vld [vmem:[%s214] sm:$0xff]
        %v218 = vld [vmem:[%s214 + $0x8] sm:$0xff]
        %v219 = vld [vmem:[%s2] sm:$0xff]
        %v220 = vld [vmem:[%s2 + $0x8] sm:$0xff]
        %v221 = vld [vmem:[%s2 + $0x10] sm:$0xff]
        %v222 = vld [vmem:[%s2 + $0x18] sm:$0xff]
        %v223 = vld [vmem:[%s2 + $0x20] sm:$0xff]
        %v224 = vld [vmem:[%s2 + $0x28] sm:$0xf]
        %v225 = vld [vmem:[%s3] sm:$0xff]
        %vm226 = vcmp.gt.f32.partialorder %v217, 0.0
        %vm227 = vcmp.gt.f32.partialorder %v218, 0.0
        %v228 = vsel %vm226, 0.0, -1e+30
        %v229 = vsel %vm227, 0.0, -1e+30
        %232 = vrot.lane.b32.xlu0 %v228, 16
        %v233 = vpop.permute.xlu0 %232
        %234 = vrot.lane.b32.xlu0 %v229, 16
        %v235 = vpop.permute.xlu0 %234
        %238 = vrot.lane.b32.xlu0 %v228, 32
        %v239 = vpop.permute.xlu0 %238
        %240 = vrot.lane.b32.xlu0 %v229, 32
        %v241 = vpop.permute.xlu0 %240
        %244 = vrot.lane.b32.xlu0 %v228, 48
        %v245 = vpop.permute.xlu0 %244
        %246 = vrot.lane.b32.xlu0 %v229, 48
        %v247 = vpop.permute.xlu0 %246
        %vm250 = vcmask 130048
        %v251 = vsel %vm250, %v228, %v233
        %v252 = vsel %vm250, %v229, %v235
        %vm253 = vcmask 261120
        %v254 = vsel %vm253, %v251, %v239
        %v255 = vsel %vm253, %v252, %v241
        %vm256 = vcmask 392192
        %v257 = vsel %vm256, %v254, %v245
        %v258 = vsel %vm256, %v255, %v247
        %vm259 = vcmask 64512
        %v261 = vsel %vm259, %v215, 0
        %v264 = vsel %vm259, %v216, 0
        %266 = vmatprep.subr.mxu0 0.0
        %267 = vmatpush1.msra.mxu0 %v219
        %268 = vmatprep.subr.mxu0 0.0
        %269 = vmatpush1.msra.mxu0 0.0
        %270 = vmatprep.subr.mxu0 0.0
        %271 = vmatpush1.msra.mxu0 0.0
        %272 = vmatprep.subr.mxu0 0.0
        %273 = vmatpush1.msra.mxu0 0.0
        %274 = vmatprep.subr.mxu0 0.0
        %275 = vmatpush1.msra.mxu0 0.0
        %276 = vmatprep.subr.mxu0 0.0
        %277 = vmatpush1.msra.mxu0 0.0
        %278 = vmatprep.subr.mxu0 0.0
        %279 = vmatpush1.msra.mxu0 0.0
        %280 = vmatprep.subr.mxu0 0.0
        %281 = vmatpush1.msra.mxu0 0.0
        %282 = vmatprep.subr.mxu0 0.0
        %283 = vmatpush1.msra.mxu0 0.0
        %284 = vmatprep.subr.mxu0 0.0
        %285 = vmatpush1.msra.mxu0 0.0
        %286 = vmatprep.subr.mxu0 0.0
        %287 = vmatpush1.msra.mxu0 0.0
        %288 = vmatprep.subr.mxu0 0.0
        %289 = vmatpush1.msra.mxu0 0.0
        %290 = vmatprep.subr.mxu0 0.0
        %291 = vmatpush1.msra.mxu0 0.0
        %292 = vmatprep.subr.mxu0 0.0
        %293 = vmatpush1.msra.mxu0 0.0
        %294 = vmatprep.subr.mxu0 0.0
        %295 = vmatpush1.msra.mxu0 0.0
        %296 = vmatprep.subr.mxu0 0.0
        %297 = vmatpush1.msra.mxu0 0.0
        %298 = vmatprep.subr.mxu0 0.0
        %299 = vmatpush1.msra.mxu0 0.0
        %300 = vmatprep.subr.mxu0 0.0
        %301 = vmatpush1.msra.mxu0 0.0
        %302 = vmatprep.subr.mxu0 0.0
        %303 = vmatpush1.msra.mxu0 0.0
        %304 = vmatprep.subr.mxu0 0.0
        %305 = vmatpush1.msra.mxu0 0.0
        %306 = vmatprep.subr.mxu0 0.0
        %307 = vmatpush1.msra.mxu0 0.0
        %308 = vmatprep.subr.mxu0 0.0
        %309 = vmatpush1.msra.mxu0 0.0
        %310 = vmatprep.subr.mxu0 0.0
        %311 = vmatpush1.msra.mxu0 0.0
        %312 = vmatprep.subr.mxu0 0.0
        %313 = vmatpush1.msra.mxu0 0.0
        %314 = vmatprep.subr.mxu0 0.0
        %315 = vmatpush1.msra.mxu0 0.0
        %316 = vmatprep.subr.mxu0 0.0
        %317 = vmatpush1.msra.mxu0 0.0
        %318 = vmatprep.subr.mxu0 0.0
        %319 = vmatpush1.msra.mxu0 0.0
        %320 = vmatprep.subr.mxu0 0.0
        %321 = vmatpush1.msra.mxu0 0.0
        %322 = vmatprep.subr.mxu0 0.0
        %323 = vmatpush1.msra.mxu0 0.0
        %324 = vmatprep.subr.mxu0 0.0
        %325 = vmatpush1.msra.mxu0 0.0
        %326 = vmatprep.subr.mxu0 0.0
        %327 = vmatpush1.msra.mxu0 0.0
        %328 = vmatprep.subr.mxu0 0.0
        %329 = vmatpush1.msra.mxu0 0.0
        %330 = vmatprep.mubr.f32.mxu0 0.0
        %331 = vmatmul.mubr.f32.gmra.mrb[0].mxu0 %v261
        %v332 = vpop.f32.mrb[0].mxu0
        %v333 = vadd.f32 0.0, %v332
        %v334 = vpop.f32.mrb[0].mxu0
        %335 = vmatprep.mubr.f32.mxu0 0.0
        %336 = vmatmul.mubr.f32.gmra.mrb[0].mxu0 %v264
        %v337 = vpop.f32.mrb[0].mxu0
        %v338 = vadd.f32 0.0, %v337
        %v339 = vpop.f32.mrb[0].mxu0
        %340 = vdwg.mxu0
        %v342 = vsel %vm250, %v333, 0
        %v345 = vsel %vm250, %v338, 0
        %347 = vmatprep.subr.mxu0 0.0
        %348 = vmatpush1.msra.mxu0 %v220
        %349 = vmatprep.subr.mxu0 0.0
        %350 = vmatpush1.msra.mxu0 %v221
        %351 = vmatprep.subr.mxu0 0.0
        %352 = vmatpush1.msra.mxu0 0.0
        %353 = vmatprep.subr.mxu0 0.0
        %354 = vmatpush1.msra.mxu0 0.0
        %355 = vmatprep.subr.mxu0 0.0
        %356 = vmatpush1.msra.mxu0 0.0
        %357 = vmatprep.subr.mxu0 0.0
        %358 = vmatpush1.msra.mxu0 0.0
        %359 = vmatprep.subr.mxu0 0.0
        %360 = vmatpush1.msra.mxu0 0.0
        %361 = vmatprep.subr.mxu0 0.0
        %362 = vmatpush1.msra.mxu0 0.0
        %363 = vmatprep.subr.mxu0 0.0
        %364 = vmatpush1.msra.mxu0 0.0
        %365 = vmatprep.subr.mxu0 0.0
        %366 = vmatpush1.msra.mxu0 0.0
        %367 = vmatprep.subr.mxu0 0.0
        %368 = vmatpush1.msra.mxu0 0.0
        %369 = vmatprep.subr.mxu0 0.0
        %370 = vmatpush1.msra.mxu0 0.0
        %371 = vmatprep.subr.mxu0 0.0
        %372 = vmatpush1.msra.mxu0 0.0
        %373 = vmatprep.subr.mxu0 0.0
        %374 = vmatpush1.msra.mxu0 0.0
        %375 = vmatprep.subr.mxu0 0.0
        %376 = vmatpush1.msra.mxu0 0.0
        %377 = vmatprep.subr.mxu0 0.0
        %378 = vmatpush1.msra.mxu0 0.0
        %379 = vmatprep.subr.mxu0 0.0
        %380 = vmatpush1.msra.mxu0 0.0
        %381 = vmatprep.subr.mxu0 0.0
        %382 = vmatpush1.msra.mxu0 0.0
        %383 = vmatprep.subr.mxu0 0.0
        %384 = vmatpush1.msra.mxu0 0.0
        %385 = vmatprep.subr.mxu0 0.0
        %386 = vmatpush1.msra.mxu0 0.0
        %387 = vmatprep.subr.mxu0 0.0
        %388 = vmatpush1.msra.mxu0 0.0
        %389 = vmatprep.subr.mxu0 0.0
        %390 = vmatpush1.msra.mxu0 0.0
        %391 = vmatprep.subr.mxu0 0.0
        %392 = vmatpush1.msra.mxu0 0.0
        %393 = vmatprep.subr.mxu0 0.0
        %394 = vmatpush1.msra.mxu0 0.0
        %395 = vmatprep.subr.mxu0 0.0
        %396 = vmatpush1.msra.mxu0 0.0
        %397 = vmatprep.subr.mxu0 0.0
        %398 = vmatpush1.msra.mxu0 0.0
        %399 = vmatprep.subr.mxu0 0.0
        %400 = vmatpush1.msra.mxu0 0.0
        %401 = vmatprep.subr.mxu0 0.0
        %402 = vmatpush1.msra.mxu0 0.0
        %403 = vmatprep.subr.mxu0 0.0
        %404 = vmatpush1.msra.mxu0 0.0
        %405 = vmatprep.subr.mxu0 0.0
        %406 = vmatpush1.msra.mxu0 0.0
        %407 = vmatprep.subr.mxu0 0.0
        %408 = vmatpush1.msra.mxu0 0.0
        %409 = vmatprep.subr.mxu0 0.0
        %410 = vmatpush1.msra.mxu0 0.0
        %411 = vmatprep.mubr.f32.mxu0 0.0
        %412 = vmatmul.mubr.f32.gmra.mrb[0].mxu0 %v342
        %v413 = vpop.f32.mrb[0].mxu0
        %v414 = vadd.f32 0.0, %v413
        %v415 = vpop.f32.mrb[0].mxu0
        %416 = vmatprep.mubr.f32.mxu0 0.0
        %417 = vmatmul.mubr.f32.gmra.mrb[0].mxu0 %v345
        %v418 = vpop.f32.mrb[0].mxu0
        %v419 = vadd.f32 0.0, %v418
        %v420 = vpop.f32.mrb[0].mxu0
        %421 = vdwg.mxu0
        %422 = vxpose.xlu0.b32.start [1/16] %v414, 128
        %423 = vxpose.xlu0.b32.cont [2/16] %v419, 128
        %424 = vxpose.xlu0.b32.cont [3/16] 0.0, 128
        %425 = vxpose.xlu0.b32.cont [4/16] 0.0, 128
        %426 = vxpose.xlu0.b32.cont [5/16] 0.0, 128
        %427 = vxpose.xlu0.b32.cont [6/16] 0.0, 128
        %428 = vxpose.xlu0.b32.cont [7/16] 0.0, 128
        %429 = vxpose.xlu0.b32.cont [8/16] 0.0, 128
        %430 = vxpose.xlu0.b32.cont [9/16] 0.0, 128
        %431 = vxpose.xlu0.b32.cont [10/16] 0.0, 128
        %432 = vxpose.xlu0.b32.cont [11/16] 0.0, 128
        %433 = vxpose.xlu0.b32.cont [12/16] 0.0, 128
        %434 = vxpose.xlu0.b32.cont [13/16] 0.0, 128
        %435 = vxpose.xlu0.b32.cont [14/16] 0.0, 128
        %436 = vxpose.xlu0.b32.cont [15/16] 0.0, 128
        %437 = vxpose.xlu0.b32.end [16/16] 0.0, 128
        %v438 = vpop.trf.xlu0
        %v439 = vpop.trf.xlu0
        %v440 = vpop.trf.xlu0
        %v441 = vpop.trf.xlu0
        %v442 = vpop.trf.xlu0
        %v443 = vpop.trf.xlu0
        %v444 = vpop.trf.xlu0
        %v445 = vpop.trf.xlu0
        %v446 = vpop.trf.xlu0
        %v447 = vpop.trf.xlu0
        %v448 = vpop.trf.xlu0
        %v449 = vpop.trf.xlu0
        %v450 = vpop.trf.xlu0
        %v451 = vpop.trf.xlu0
        %v452 = vpop.trf.xlu0
        %v453 = vpop.trf.xlu0
        %455 = vset.pattern.permute.xlu0 4
        %456 = vperm.xlu0 %455, %v414
        %v457 = vpop.permute.xlu0 %456
        %460 = vset.pattern.permute.xlu0 4
        %461 = vperm.xlu0 %460, %v419
        %v462 = vpop.permute.xlu0 %461
        %464 = vset.pattern.permute.xlu0 5
        %465 = vperm.xlu0 %464, %v414
        %v466 = vpop.permute.xlu0 %465
        %468 = vset.pattern.permute.xlu0 5
        %469 = vperm.xlu0 %468, %v419
        %v470 = vpop.permute.xlu0 %469
        %472 = vset.pattern.permute.xlu0 6
        %473 = vperm.xlu0 %472, %v414
        %v474 = vpop.permute.xlu0 %473
        %476 = vset.pattern.permute.xlu0 6
        %477 = vperm.xlu0 %476, %v419
        %v478 = vpop.permute.xlu0 %477
        %480 = vset.pattern.permute.xlu0 7
        %481 = vperm.xlu0 %480, %v414
        %v482 = vpop.permute.xlu0 %481
        %484 = vset.pattern.permute.xlu0 7
        %485 = vperm.xlu0 %484, %v419
        %v486 = vpop.permute.xlu0 %485
        %v488 = vsel %vm250, %v457, %v466
        %v489 = vsel %vm250, %v462, %v470
        %v490 = vsel %vm253, %v488, %v474
        %v491 = vsel %vm253, %v489, %v478
        %v492 = vsel %vm256, %v490, %v482
        %v493 = vsel %vm256, %v491, %v486
        %v494 = vlaneseq
        %v495 = vshrl.u32 %v494, 7
        %v496 = vsub.s32 0, %v495
        %v497 = vrot.slane %v438, %v496
        %v498 = vlaneseq
        %v499 = vshrl.u32 %v498, 7
        %v500 = vsub.s32 1, %v499
        %v501 = vrot.slane %v438, %v500
        %v502 = vlaneseq
        %v503 = vshrl.u32 %v502, 7
        %v504 = vsub.s32 2, %v503
        %v505 = vrot.slane %v438, %v504
        %v506 = vlaneseq
        %v507 = vshrl.u32 %v506, 7
        %v508 = vsub.s32 3, %v507
        %v509 = vrot.slane %v438, %v508
        %511 = vrot.lane.b32.xlu0 %v501, 16
        %v512 = vpop.permute.xlu0 %511
        %515 = vrot.lane.b32.xlu0 %v505, 32
        %v516 = vpop.permute.xlu0 %515
        %519 = vrot.lane.b32.xlu0 %v509, 48
        %v520 = vpop.permute.xlu0 %519
        %v522 = vsel %vm250, %v497, %v512
        %v523 = vsel %vm253, %v522, %v516
        %v524 = vsel %vm256, %v523, %v520
        %v525 = vadd.f32 %v492, %v524
        %v526 = vadd.f32 %v493, %v524
        %vm527 = vcmp.gt.f32.partialorder %v525, 0.0
        %vm528 = vcmp.gt.f32.partialorder %v526, 0.0
        %v529 = vmul.f32 %v525, 0.2
        %v530 = vmul.f32 %v526, 0.2
        %v531 = vsel %vm527, %v525, %v529
        %v532 = vsel %vm528, %v526, %v530
        %v533 = vadd.f32 %v531, %v257
        %v534 = vadd.f32 %v532, %v258
        %v535 = vsel %vm250, %v533, -inf
        %536 = vmax.xlane.f32.xlu0 %v535
        %v537 = vpop.xlane.xlu0 %536
        %v538 = vsel %vm250, %v534, -inf
        %539 = vmax.xlane.f32.xlu0 %v538
        %v540 = vpop.xlane.xlu0 %539
        %vm541 = vcmask 261248
        %v542 = vsel %vm541, %v533, -inf
        %543 = vmax.xlane.f32.xlu0 %v542
        %v544 = vpop.xlane.xlu0 %543
        %v545 = vsel %vm541, %v534, -inf
        %546 = vmax.xlane.f32.xlu0 %v545
        %v547 = vpop.xlane.xlu0 %546
        %vm548 = vcmask 392448
        %v549 = vsel %vm548, %v533, -inf
        %550 = vmax.xlane.f32.xlu0 %v549
        %v551 = vpop.xlane.xlu0 %550
        %v552 = vsel %vm548, %v534, -inf
        %553 = vmax.xlane.f32.xlu0 %v552
        %v554 = vpop.xlane.xlu0 %553
        %vm555 = vcmask 523648
        %v556 = vsel %vm555, %v533, -inf
        %557 = vmax.xlane.f32.xlu0 %v556
        %v558 = vpop.xlane.xlu0 %557
        %v559 = vsel %vm555, %v534, -inf
        %560 = vmax.xlane.f32.xlu0 %v559
        %v561 = vpop.xlane.xlu0 %560
        %v562 = vsel %vm250, %v537, %v544
        %v563 = vsel %vm250, %v540, %v547
        %v564 = vsel %vm253, %v562, %v551
        %v565 = vsel %vm253, %v563, %v554
        %v566 = vsel %vm256, %v564, %v558
        %v567 = vsel %vm256, %v565, %v561
        %v568 = vsub.f32 %v533, %v566
        %v569 = vsub.f32 %v534, %v567
        %v570 = vmul.f32 %v568, 1.442695
        %v571 = vpow.pop %v570
        %v572 = vmul.f32 %v569, 1.442695
        %v573 = vpow.pop %v572
        %v574 = vsel %vm250, %v571, 0.0
        %575 = vadd.xlane.f32.xlu0 %v574
        %v576 = vpop.xlane.xlu0 %575
        %v577 = vsel %vm250, %v573, 0.0
        %578 = vadd.xlane.f32.xlu0 %v577
        %v579 = vpop.xlane.xlu0 %578
        %v580 = vrcp.pop %v576
        %v581 = vrcp.pop %v579
        %584 = vrot.lane.b32.xlu0 %v571, 112
        %v585 = vpop.permute.xlu0 %584
        %586 = vrot.lane.b32.xlu0 %v573, 112
        %v587 = vpop.permute.xlu0 %586
        %v590 = vsel %vm250, %v585, 0.0
        %591 = vadd.xlane.f32.xlu0 %v590
        %v592 = vpop.xlane.xlu0 %591
        %v593 = vsel %vm250, %v587, 0.0
        %594 = vadd.xlane.f32.xlu0 %v593
        %v595 = vpop.xlane.xlu0 %594
        %v596 = vrcp.pop %v592
        %v597 = vrcp.pop %v595
        %598 = vrot.lane.b32.xlu0 %v571, 96
        %v599 = vpop.permute.xlu0 %598
        %600 = vrot.lane.b32.xlu0 %v573, 96
        %v601 = vpop.permute.xlu0 %600
        %v604 = vsel %vm250, %v599, 0.0
        %605 = vadd.xlane.f32.xlu0 %v604
        %v606 = vpop.xlane.xlu0 %605
        %v607 = vsel %vm250, %v601, 0.0
        %608 = vadd.xlane.f32.xlu0 %v607
        %v609 = vpop.xlane.xlu0 %608
        %v610 = vrcp.pop %v606
        %v611 = vrcp.pop %v609
        %612 = vrot.lane.b32.xlu0 %v571, 80
        %v613 = vpop.permute.xlu0 %612
        %614 = vrot.lane.b32.xlu0 %v573, 80
        %v615 = vpop.permute.xlu0 %614
        %v618 = vsel %vm250, %v613, 0.0
        %619 = vadd.xlane.f32.xlu0 %v618
        %v620 = vpop.xlane.xlu0 %619
        %v621 = vsel %vm250, %v615, 0.0
        %622 = vadd.xlane.f32.xlu0 %v621
        %v623 = vpop.xlane.xlu0 %622
        %v624 = vrcp.pop %v620
        %v625 = vrcp.pop %v623
        %v626 = vsel %vm250, %v580, %v596
        %v627 = vsel %vm250, %v581, %v597
        %v628 = vsel %vm253, %v626, %v610
        %v629 = vsel %vm253, %v627, %v611
        %v630 = vsel %vm256, %v628, %v624
        %v631 = vsel %vm256, %v629, %v625
        %v632 = vmul.f32 %v571, %v630
        %v633 = vmul.f32 %v573, %v631
        %634 = vrot.lane.b32.xlu0 %v333, 124
        %v635 = vpop.permute.xlu0 %634
        %636 = vrot.lane.b32.xlu0 %v338, 124
        %v637 = vpop.permute.xlu0 %636
        %640 = vrot.lane.b32.xlu0 %v333, 120
        %v641 = vpop.permute.xlu0 %640
        %642 = vrot.lane.b32.xlu0 %v338, 120
        %v643 = vpop.permute.xlu0 %642
        %646 = vrot.lane.b32.xlu0 %v333, 116
        %v647 = vpop.permute.xlu0 %646
        %648 = vrot.lane.b32.xlu0 %v338, 116
        %v649 = vpop.permute.xlu0 %648
        %vm652 = vcmask 523264
        %v654 = vsel %vm652, %v632, 0
        %v657 = vsel %vm652, %v633, 0
        %659 = vmatprep.subr.mxu0 0.0
        %660 = vmatpush1.msra.mxu0 %v333
        %661 = vmatprep.subr.mxu0 0.0
        %662 = vmatpush1.msra.mxu0 %v338
        %663 = vmatprep.subr.mxu0 0.0
        %664 = vmatpush1.msra.mxu0 %v635
        %665 = vmatprep.subr.mxu0 0.0
        %666 = vmatpush1.msra.mxu0 %v637
        %667 = vmatprep.subr.mxu0 0.0
        %668 = vmatpush1.msra.mxu0 %v641
        %669 = vmatprep.subr.mxu0 0.0
        %670 = vmatpush1.msra.mxu0 %v643
        %671 = vmatprep.subr.mxu0 0.0
        %672 = vmatpush1.msra.mxu0 %v647
        %673 = vmatprep.subr.mxu0 0.0
        %674 = vmatpush1.msra.mxu0 %v649
        %675 = vmatprep.subr.mxu0 0.0
        %676 = vmatpush1.msra.mxu0 0.0
        %677 = vmatprep.subr.mxu0 0.0
        %678 = vmatpush1.msra.mxu0 0.0
        %679 = vmatprep.subr.mxu0 0.0
        %680 = vmatpush1.msra.mxu0 0.0
        %681 = vmatprep.subr.mxu0 0.0
        %682 = vmatpush1.msra.mxu0 0.0
        %683 = vmatprep.subr.mxu0 0.0
        %684 = vmatpush1.msra.mxu0 0.0
        %685 = vmatprep.subr.mxu0 0.0
        %686 = vmatpush1.msra.mxu0 0.0
        %687 = vmatprep.subr.mxu0 0.0
        %688 = vmatpush1.msra.mxu0 0.0
        %689 = vmatprep.subr.mxu0 0.0
        %690 = vmatpush1.msra.mxu0 0.0
        %691 = vmatprep.subr.mxu0 0.0
        %692 = vmatpush1.msra.mxu0 0.0
        %693 = vmatprep.subr.mxu0 0.0
        %694 = vmatpush1.msra.mxu0 0.0
        %695 = vmatprep.subr.mxu0 0.0
        %696 = vmatpush1.msra.mxu0 0.0
        %697 = vmatprep.subr.mxu0 0.0
        %698 = vmatpush1.msra.mxu0 0.0
        %699 = vmatprep.subr.mxu0 0.0
        %700 = vmatpush1.msra.mxu0 0.0
        %701 = vmatprep.subr.mxu0 0.0
        %702 = vmatpush1.msra.mxu0 0.0
        %703 = vmatprep.subr.mxu0 0.0
        %704 = vmatpush1.msra.mxu0 0.0
        %705 = vmatprep.subr.mxu0 0.0
        %706 = vmatpush1.msra.mxu0 0.0
        %707 = vmatprep.subr.mxu0 0.0
        %708 = vmatpush1.msra.mxu0 0.0
        %709 = vmatprep.subr.mxu0 0.0
        %710 = vmatpush1.msra.mxu0 0.0
        %711 = vmatprep.subr.mxu0 0.0
        %712 = vmatpush1.msra.mxu0 0.0
        %713 = vmatprep.subr.mxu0 0.0
        %714 = vmatpush1.msra.mxu0 0.0
        %715 = vmatprep.subr.mxu0 0.0
        %716 = vmatpush1.msra.mxu0 0.0
        %717 = vmatprep.subr.mxu0 0.0
        %718 = vmatpush1.msra.mxu0 0.0
        %719 = vmatprep.subr.mxu0 0.0
        %720 = vmatpush1.msra.mxu0 0.0
        %721 = vmatprep.subr.mxu0 0.0
        %722 = vmatpush1.msra.mxu0 0.0
        %723 = vmatprep.mubr.f32.mxu0 0.0
        %724 = vmatmul.mubr.f32.gmra.mrb[0].mxu0 %v654
        %v725 = vpop.f32.mrb[0].mxu0
        %v726 = vadd.f32 0.0, %v725
        %v727 = vpop.f32.mrb[0].mxu0
        %728 = vmatprep.mubr.f32.mxu0 0.0
        %729 = vmatmul.mubr.f32.gmra.mrb[0].mxu0 %v657
        %v730 = vpop.f32.mrb[0].mxu0
        %v731 = vadd.f32 0.0, %v730
        %v732 = vpop.f32.mrb[0].mxu0
        %733 = vdwg.mxu0
        %v734 = vmul.f32 %v726, 0.25
        %v735 = vmul.f32 %v731, 0.25
        %v736 = vlaneseq
        %v737 = vshrl.u32 %v736, 7
        %v738 = vsub.s32 0, %v737
        %v739 = vrot.slane %v225, %v738
        %v740 = vadd.f32 %v734, %v739
        %v741 = vadd.f32 %v735, %v739
        %v742 = vmax.f32 %v740, 0.0
        %v743 = vmax.f32 %v741, 0.0
        %v744 = vlaneseq
        %v745 = vshrl.u32 %v744, 7
        %v746 = vsub.s32 1, %v745
        %v747 = vrot.slane %v225, %v746
        %vm748 = vcmask 31744
        %v750 = vsel %vm748, %v742, 0
        %v753 = vsel %vm748, %v743, 0
        %vm755 = vcmask 1043456
        %v757 = vsel %vm755, %v224, 0
        %759 = vmatprep.subr.mxu0 0.0
        %760 = vmatpush1.msra.mxu0 %v757
        %761 = vmatprep.subr.mxu0 0.0
        %762 = vmatpush1.msra.mxu0 0.0
        %763 = vmatprep.subr.mxu0 0.0
        %764 = vmatpush1.msra.mxu0 0.0
        %765 = vmatprep.subr.mxu0 0.0
        %766 = vmatpush1.msra.mxu0 0.0
        %767 = vmatprep.subr.mxu0 0.0
        %768 = vmatpush1.msra.mxu0 0.0
        %769 = vmatprep.subr.mxu0 0.0
        %770 = vmatpush1.msra.mxu0 0.0
        %771 = vmatprep.subr.mxu0 0.0
        %772 = vmatpush1.msra.mxu0 0.0
        %773 = vmatprep.subr.mxu0 0.0
        %774 = vmatpush1.msra.mxu0 0.0
        %775 = vmatprep.subr.mxu0 0.0
        %776 = vmatpush1.msra.mxu0 0.0
        %777 = vmatprep.subr.mxu0 0.0
        %778 = vmatpush1.msra.mxu0 0.0
        %779 = vmatprep.subr.mxu0 0.0
        %780 = vmatpush1.msra.mxu0 0.0
        %781 = vmatprep.subr.mxu0 0.0
        %782 = vmatpush1.msra.mxu0 0.0
        %783 = vmatprep.subr.mxu0 0.0
        %784 = vmatpush1.msra.mxu0 0.0
        %785 = vmatprep.subr.mxu0 0.0
        %786 = vmatpush1.msra.mxu0 0.0
        %787 = vmatprep.subr.mxu0 0.0
        %788 = vmatpush1.msra.mxu0 0.0
        %789 = vmatprep.subr.mxu0 0.0
        %790 = vmatpush1.msra.mxu0 0.0
        %791 = vmatprep.subr.mxu0 0.0
        %792 = vmatpush1.msra.mxu0 0.0
        %793 = vmatprep.subr.mxu0 0.0
        %794 = vmatpush1.msra.mxu0 0.0
        %795 = vmatprep.subr.mxu0 0.0
        %796 = vmatpush1.msra.mxu0 0.0
        %797 = vmatprep.subr.mxu0 0.0
        %798 = vmatpush1.msra.mxu0 0.0
        %799 = vmatprep.subr.mxu0 0.0
        %800 = vmatpush1.msra.mxu0 0.0
        %801 = vmatprep.subr.mxu0 0.0
        %802 = vmatpush1.msra.mxu0 0.0
        %803 = vmatprep.subr.mxu0 0.0
        %804 = vmatpush1.msra.mxu0 0.0
        %805 = vmatprep.subr.mxu0 0.0
        %806 = vmatpush1.msra.mxu0 0.0
        %807 = vmatprep.subr.mxu0 0.0
        %808 = vmatpush1.msra.mxu0 0.0
        %809 = vmatprep.subr.mxu0 0.0
        %810 = vmatpush1.msra.mxu0 0.0
        %811 = vmatprep.subr.mxu0 0.0
        %812 = vmatpush1.msra.mxu0 0.0
        %813 = vmatprep.subr.mxu0 0.0
        %814 = vmatpush1.msra.mxu0 0.0
        %815 = vmatprep.subr.mxu0 0.0
        %816 = vmatpush1.msra.mxu0 0.0
        %817 = vmatprep.subr.mxu0 0.0
        %818 = vmatpush1.msra.mxu0 0.0
        %819 = vmatprep.subr.mxu0 0.0
        %820 = vmatpush1.msra.mxu0 0.0
        %821 = vmatprep.subr.mxu0 0.0
        %822 = vmatpush1.msra.mxu0 0.0
        %823 = vmatprep.mubr.f32.mxu0 0.0
        %824 = vmatmul.mubr.f32.gmra.mrb[0].mxu0 %v750
        %v825 = vpop.f32.mrb[0].mxu0
        %v826 = vadd.f32 %v747, %v825
        %v827 = vpop.f32.mrb[0].mxu0
        %828 = vmatprep.mubr.f32.mxu0 0.0
        %829 = vmatmul.mubr.f32.gmra.mrb[0].mxu0 %v753
        %v830 = vpop.f32.mrb[0].mxu0
        %v831 = vadd.f32 %v747, %v830
        %v832 = vpop.f32.mrb[0].mxu0
        %833 = vdwg.mxu0
        %v835 = vsel %vm250, %v826, 0
        %v838 = vsel %vm250, %v831, 0
        %840 = vmatprep.subr.mxu0 0.0
        %841 = vmatpush1.msra.mxu0 %v222
        %842 = vmatprep.subr.mxu0 0.0
        %843 = vmatpush1.msra.mxu0 %v223
        %844 = vmatprep.subr.mxu0 0.0
        %845 = vmatpush1.msra.mxu0 0.0
        %846 = vmatprep.subr.mxu0 0.0
        %847 = vmatpush1.msra.mxu0 0.0
        %848 = vmatprep.subr.mxu0 0.0
        %849 = vmatpush1.msra.mxu0 0.0
        %850 = vmatprep.subr.mxu0 0.0
        %851 = vmatpush1.msra.mxu0 0.0
        %852 = vmatprep.subr.mxu0 0.0
        %853 = vmatpush1.msra.mxu0 0.0
        %854 = vmatprep.subr.mxu0 0.0
        %855 = vmatpush1.msra.mxu0 0.0
        %856 = vmatprep.subr.mxu0 0.0
        %857 = vmatpush1.msra.mxu0 0.0
        %858 = vmatprep.subr.mxu0 0.0
        %859 = vmatpush1.msra.mxu0 0.0
        %860 = vmatprep.subr.mxu0 0.0
        %861 = vmatpush1.msra.mxu0 0.0
        %862 = vmatprep.subr.mxu0 0.0
        %863 = vmatpush1.msra.mxu0 0.0
        %864 = vmatprep.subr.mxu0 0.0
        %865 = vmatpush1.msra.mxu0 0.0
        %866 = vmatprep.subr.mxu0 0.0
        %867 = vmatpush1.msra.mxu0 0.0
        %868 = vmatprep.subr.mxu0 0.0
        %869 = vmatpush1.msra.mxu0 0.0
        %870 = vmatprep.subr.mxu0 0.0
        %871 = vmatpush1.msra.mxu0 0.0
        %872 = vmatprep.subr.mxu0 0.0
        %873 = vmatpush1.msra.mxu0 0.0
        %874 = vmatprep.subr.mxu0 0.0
        %875 = vmatpush1.msra.mxu0 0.0
        %876 = vmatprep.subr.mxu0 0.0
        %877 = vmatpush1.msra.mxu0 0.0
        %878 = vmatprep.subr.mxu0 0.0
        %879 = vmatpush1.msra.mxu0 0.0
        %880 = vmatprep.subr.mxu0 0.0
        %881 = vmatpush1.msra.mxu0 0.0
        %882 = vmatprep.subr.mxu0 0.0
        %883 = vmatpush1.msra.mxu0 0.0
        %884 = vmatprep.subr.mxu0 0.0
        %885 = vmatpush1.msra.mxu0 0.0
        %886 = vmatprep.subr.mxu0 0.0
        %887 = vmatpush1.msra.mxu0 0.0
        %888 = vmatprep.subr.mxu0 0.0
        %889 = vmatpush1.msra.mxu0 0.0
        %890 = vmatprep.subr.mxu0 0.0
        %891 = vmatpush1.msra.mxu0 0.0
        %892 = vmatprep.subr.mxu0 0.0
        %893 = vmatpush1.msra.mxu0 0.0
        %894 = vmatprep.subr.mxu0 0.0
        %895 = vmatpush1.msra.mxu0 0.0
        %896 = vmatprep.subr.mxu0 0.0
        %897 = vmatpush1.msra.mxu0 0.0
        %898 = vmatprep.subr.mxu0 0.0
        %899 = vmatpush1.msra.mxu0 0.0
        %900 = vmatprep.subr.mxu0 0.0
        %901 = vmatpush1.msra.mxu0 0.0
        %902 = vmatprep.subr.mxu0 0.0
        %903 = vmatpush1.msra.mxu0 0.0
        %904 = vmatprep.mubr.f32.mxu0 0.0
        %905 = vmatmul.mubr.f32.gmra.mrb[0].mxu0 %v835
        %v906 = vpop.f32.mrb[0].mxu0
        %v907 = vadd.f32 0.0, %v906
        %v908 = vpop.f32.mrb[0].mxu0
        %909 = vmatprep.mubr.f32.mxu0 0.0
        %910 = vmatmul.mubr.f32.gmra.mrb[0].mxu0 %v838
        %v911 = vpop.f32.mrb[0].mxu0
        %v912 = vadd.f32 0.0, %v911
        %v913 = vpop.f32.mrb[0].mxu0
        %914 = vdwg.mxu0
        %915 = vxpose.xlu0.b32.start [1/16] %v907, 128
        %916 = vxpose.xlu0.b32.cont [2/16] %v912, 128
        %917 = vxpose.xlu0.b32.cont [3/16] 0.0, 128
        %918 = vxpose.xlu0.b32.cont [4/16] 0.0, 128
        %919 = vxpose.xlu0.b32.cont [5/16] 0.0, 128
        %920 = vxpose.xlu0.b32.cont [6/16] 0.0, 128
        %921 = vxpose.xlu0.b32.cont [7/16] 0.0, 128
        %922 = vxpose.xlu0.b32.cont [8/16] 0.0, 128
        %923 = vxpose.xlu0.b32.cont [9/16] 0.0, 128
        %924 = vxpose.xlu0.b32.cont [10/16] 0.0, 128
        %925 = vxpose.xlu0.b32.cont [11/16] 0.0, 128
        %926 = vxpose.xlu0.b32.cont [12/16] 0.0, 128
        %927 = vxpose.xlu0.b32.cont [13/16] 0.0, 128
        %928 = vxpose.xlu0.b32.cont [14/16] 0.0, 128
        %929 = vxpose.xlu0.b32.cont [15/16] 0.0, 128
        %930 = vxpose.xlu0.b32.end [16/16] 0.0, 128
        %v931 = vpop.trf.xlu0
        %v932 = vpop.trf.xlu0
        %v933 = vpop.trf.xlu0
        %v934 = vpop.trf.xlu0
        %v935 = vpop.trf.xlu0
        %v936 = vpop.trf.xlu0
        %v937 = vpop.trf.xlu0
        %v938 = vpop.trf.xlu0
        %v939 = vpop.trf.xlu0
        %v940 = vpop.trf.xlu0
        %v941 = vpop.trf.xlu0
        %v942 = vpop.trf.xlu0
        %v943 = vpop.trf.xlu0
        %v944 = vpop.trf.xlu0
        %v945 = vpop.trf.xlu0
        %v946 = vpop.trf.xlu0
        %948 = vset.pattern.permute.xlu0 4
        %949 = vperm.xlu0 %948, %v907
        %v950 = vpop.permute.xlu0 %949
        %953 = vset.pattern.permute.xlu0 4
        %954 = vperm.xlu0 %953, %v912
        %v955 = vpop.permute.xlu0 %954
        %957 = vset.pattern.permute.xlu0 5
        %958 = vperm.xlu0 %957, %v907
        %v959 = vpop.permute.xlu0 %958
        %961 = vset.pattern.permute.xlu0 5
        %962 = vperm.xlu0 %961, %v912
        %v963 = vpop.permute.xlu0 %962
        %965 = vset.pattern.permute.xlu0 6
        %966 = vperm.xlu0 %965, %v907
        %v967 = vpop.permute.xlu0 %966
        %969 = vset.pattern.permute.xlu0 6
        %970 = vperm.xlu0 %969, %v912
        %v971 = vpop.permute.xlu0 %970
        %973 = vset.pattern.permute.xlu0 7
        %974 = vperm.xlu0 %973, %v907
        %v975 = vpop.permute.xlu0 %974
        %977 = vset.pattern.permute.xlu0 7
        %978 = vperm.xlu0 %977, %v912
        %v979 = vpop.permute.xlu0 %978
        %v981 = vsel %vm250, %v950, %v959
        %v982 = vsel %vm250, %v955, %v963
        %v983 = vsel %vm253, %v981, %v967
        %v984 = vsel %vm253, %v982, %v971
        %v985 = vsel %vm256, %v983, %v975
        %v986 = vsel %vm256, %v984, %v979
        %v987 = vlaneseq
        %v988 = vshrl.u32 %v987, 7
        %v989 = vsub.s32 0, %v988
        %v990 = vrot.slane %v931, %v989
        %v991 = vlaneseq
        %v992 = vshrl.u32 %v991, 7
        %v993 = vsub.s32 1, %v992
        %v994 = vrot.slane %v931, %v993
        %v995 = vlaneseq
        %v996 = vshrl.u32 %v995, 7
        %v997 = vsub.s32 2, %v996
        %v998 = vrot.slane %v931, %v997
        %v999 = vlaneseq
        %v1000 = vshrl.u32 %v999, 7
        %v1001 = vsub.s32 3, %v1000
        %v1002 = vrot.slane %v931, %v1001
        %1004 = vrot.lane.b32.xlu0 %v994, 16
        %v1005 = vpop.permute.xlu0 %1004
        %1008 = vrot.lane.b32.xlu0 %v998, 32
        %v1009 = vpop.permute.xlu0 %1008
        %1012 = vrot.lane.b32.xlu0 %v1002, 48
        %v1013 = vpop.permute.xlu0 %1012
        %v1015 = vsel %vm250, %v990, %v1005
        %v1016 = vsel %vm253, %v1015, %v1009
        %v1017 = vsel %vm256, %v1016, %v1013
        %v1018 = vadd.f32 %v985, %v1017
        %v1019 = vadd.f32 %v986, %v1017
        %vm1020 = vcmp.gt.f32.partialorder %v1018, 0.0
        %vm1021 = vcmp.gt.f32.partialorder %v1019, 0.0
        %v1022 = vmul.f32 %v1018, 0.2
        %v1023 = vmul.f32 %v1019, 0.2
        %v1024 = vsel %vm1020, %v1018, %v1022
        %v1025 = vsel %vm1021, %v1019, %v1023
        %v1026 = vadd.f32 %v1024, %v257
        %v1027 = vadd.f32 %v1025, %v258
        %v1028 = vsel %vm250, %v1026, -inf
        %1029 = vmax.xlane.f32.xlu0 %v1028
        %v1030 = vpop.xlane.xlu0 %1029
        %v1031 = vsel %vm250, %v1027, -inf
        %1032 = vmax.xlane.f32.xlu0 %v1031
        %v1033 = vpop.xlane.xlu0 %1032
        %v1034 = vsel %vm541, %v1026, -inf
        %1035 = vmax.xlane.f32.xlu0 %v1034
        %v1036 = vpop.xlane.xlu0 %1035
        %v1037 = vsel %vm541, %v1027, -inf
        %1038 = vmax.xlane.f32.xlu0 %v1037
        %v1039 = vpop.xlane.xlu0 %1038
        %v1040 = vsel %vm548, %v1026, -inf
        %1041 = vmax.xlane.f32.xlu0 %v1040
        %v1042 = vpop.xlane.xlu0 %1041
        %v1043 = vsel %vm548, %v1027, -inf
        %1044 = vmax.xlane.f32.xlu0 %v1043
        %v1045 = vpop.xlane.xlu0 %1044
        %v1046 = vsel %vm555, %v1026, -inf
        %1047 = vmax.xlane.f32.xlu0 %v1046
        %v1048 = vpop.xlane.xlu0 %1047
        %v1049 = vsel %vm555, %v1027, -inf
        %1050 = vmax.xlane.f32.xlu0 %v1049
        %v1051 = vpop.xlane.xlu0 %1050
        %v1052 = vsel %vm250, %v1030, %v1036
        %v1053 = vsel %vm250, %v1033, %v1039
        %v1054 = vsel %vm253, %v1052, %v1042
        %v1055 = vsel %vm253, %v1053, %v1045
        %v1056 = vsel %vm256, %v1054, %v1048
        %v1057 = vsel %vm256, %v1055, %v1051
        %v1058 = vsub.f32 %v1026, %v1056
        %v1059 = vsub.f32 %v1027, %v1057
        %v1060 = vmul.f32 %v1058, 1.442695
        %v1061 = vpow.pop %v1060
        %v1062 = vmul.f32 %v1059, 1.442695
        %v1063 = vpow.pop %v1062
        %v1064 = vsel %vm250, %v1061, 0.0
        %1065 = vadd.xlane.f32.xlu0 %v1064
        %v1066 = vpop.xlane.xlu0 %1065
        %v1067 = vsel %vm250, %v1063, 0.0
        %1068 = vadd.xlane.f32.xlu0 %v1067
        %v1069 = vpop.xlane.xlu0 %1068
        %v1070 = vrcp.pop %v1066
        %v1071 = vrcp.pop %v1069
        %1074 = vrot.lane.b32.xlu0 %v1061, 112
        %v1075 = vpop.permute.xlu0 %1074
        %1076 = vrot.lane.b32.xlu0 %v1063, 112
        %v1077 = vpop.permute.xlu0 %1076
        %v1080 = vsel %vm250, %v1075, 0.0
        %1081 = vadd.xlane.f32.xlu0 %v1080
        %v1082 = vpop.xlane.xlu0 %1081
        %v1083 = vsel %vm250, %v1077, 0.0
        %1084 = vadd.xlane.f32.xlu0 %v1083
        %v1085 = vpop.xlane.xlu0 %1084
        %v1086 = vrcp.pop %v1082
        %v1087 = vrcp.pop %v1085
        %1088 = vrot.lane.b32.xlu0 %v1061, 96
        %v1089 = vpop.permute.xlu0 %1088
        %1090 = vrot.lane.b32.xlu0 %v1063, 96
        %v1091 = vpop.permute.xlu0 %1090
        %v1094 = vsel %vm250, %v1089, 0.0
        %1095 = vadd.xlane.f32.xlu0 %v1094
        %v1096 = vpop.xlane.xlu0 %1095
        %v1097 = vsel %vm250, %v1091, 0.0
        %1098 = vadd.xlane.f32.xlu0 %v1097
        %v1099 = vpop.xlane.xlu0 %1098
        %v1100 = vrcp.pop %v1096
        %v1101 = vrcp.pop %v1099
        %1102 = vrot.lane.b32.xlu0 %v1061, 80
        %v1103 = vpop.permute.xlu0 %1102
        %1104 = vrot.lane.b32.xlu0 %v1063, 80
        %v1105 = vpop.permute.xlu0 %1104
        %v1108 = vsel %vm250, %v1103, 0.0
        %1109 = vadd.xlane.f32.xlu0 %v1108
        %v1110 = vpop.xlane.xlu0 %1109
        %v1111 = vsel %vm250, %v1105, 0.0
        %1112 = vadd.xlane.f32.xlu0 %v1111
        %v1113 = vpop.xlane.xlu0 %1112
        %v1114 = vrcp.pop %v1110
        %v1115 = vrcp.pop %v1113
        %v1116 = vsel %vm250, %v1070, %v1086
        %v1117 = vsel %vm250, %v1071, %v1087
        %v1118 = vsel %vm253, %v1116, %v1100
        %v1119 = vsel %vm253, %v1117, %v1101
        %v1120 = vsel %vm256, %v1118, %v1114
        %v1121 = vsel %vm256, %v1119, %v1115
        %v1122 = vmul.f32 %v1061, %v1120
        %v1123 = vmul.f32 %v1063, %v1121
        %1124 = vrot.lane.b32.xlu0 %v826, 124
        %v1125 = vpop.permute.xlu0 %1124
        %1126 = vrot.lane.b32.xlu0 %v831, 124
        %v1127 = vpop.permute.xlu0 %1126
        %1130 = vrot.lane.b32.xlu0 %v826, 120
        %v1131 = vpop.permute.xlu0 %1130
        %1132 = vrot.lane.b32.xlu0 %v831, 120
        %v1133 = vpop.permute.xlu0 %1132
        %1136 = vrot.lane.b32.xlu0 %v826, 116
        %v1137 = vpop.permute.xlu0 %1136
        %1138 = vrot.lane.b32.xlu0 %v831, 116
        %v1139 = vpop.permute.xlu0 %1138
        %v1143 = vsel %vm652, %v1122, 0
        %v1146 = vsel %vm652, %v1123, 0
        %1148 = vmatprep.subr.mxu0 0.0
        %1149 = vmatpush1.msra.mxu0 %v826
        %1150 = vmatprep.subr.mxu0 0.0
        %1151 = vmatpush1.msra.mxu0 %v831
        %1152 = vmatprep.subr.mxu0 0.0
        %1153 = vmatpush1.msra.mxu0 %v1125
        %1154 = vmatprep.subr.mxu0 0.0
        %1155 = vmatpush1.msra.mxu0 %v1127
        %1156 = vmatprep.subr.mxu0 0.0
        %1157 = vmatpush1.msra.mxu0 %v1131
        %1158 = vmatprep.subr.mxu0 0.0
        %1159 = vmatpush1.msra.mxu0 %v1133
        %1160 = vmatprep.subr.mxu0 0.0
        %1161 = vmatpush1.msra.mxu0 %v1137
        %1162 = vmatprep.subr.mxu0 0.0
        %1163 = vmatpush1.msra.mxu0 %v1139
        %1164 = vmatprep.subr.mxu0 0.0
        %1165 = vmatpush1.msra.mxu0 0.0
        %1166 = vmatprep.subr.mxu0 0.0
        %1167 = vmatpush1.msra.mxu0 0.0
        %1168 = vmatprep.subr.mxu0 0.0
        %1169 = vmatpush1.msra.mxu0 0.0
        %1170 = vmatprep.subr.mxu0 0.0
        %1171 = vmatpush1.msra.mxu0 0.0
        %1172 = vmatprep.subr.mxu0 0.0
        %1173 = vmatpush1.msra.mxu0 0.0
        %1174 = vmatprep.subr.mxu0 0.0
        %1175 = vmatpush1.msra.mxu0 0.0
        %1176 = vmatprep.subr.mxu0 0.0
        %1177 = vmatpush1.msra.mxu0 0.0
        %1178 = vmatprep.subr.mxu0 0.0
        %1179 = vmatpush1.msra.mxu0 0.0
        %1180 = vmatprep.subr.mxu0 0.0
        %1181 = vmatpush1.msra.mxu0 0.0
        %1182 = vmatprep.subr.mxu0 0.0
        %1183 = vmatpush1.msra.mxu0 0.0
        %1184 = vmatprep.subr.mxu0 0.0
        %1185 = vmatpush1.msra.mxu0 0.0
        %1186 = vmatprep.subr.mxu0 0.0
        %1187 = vmatpush1.msra.mxu0 0.0
        %1188 = vmatprep.subr.mxu0 0.0
        %1189 = vmatpush1.msra.mxu0 0.0
        %1190 = vmatprep.subr.mxu0 0.0
        %1191 = vmatpush1.msra.mxu0 0.0
        %1192 = vmatprep.subr.mxu0 0.0
        %1193 = vmatpush1.msra.mxu0 0.0
        %1194 = vmatprep.subr.mxu0 0.0
        %1195 = vmatpush1.msra.mxu0 0.0
        %1196 = vmatprep.subr.mxu0 0.0
        %1197 = vmatpush1.msra.mxu0 0.0
        %1198 = vmatprep.subr.mxu0 0.0
        %1199 = vmatpush1.msra.mxu0 0.0
        %1200 = vmatprep.subr.mxu0 0.0
        %1201 = vmatpush1.msra.mxu0 0.0
        %1202 = vmatprep.subr.mxu0 0.0
        %1203 = vmatpush1.msra.mxu0 0.0
        %1204 = vmatprep.subr.mxu0 0.0
        %1205 = vmatpush1.msra.mxu0 0.0
        %1206 = vmatprep.subr.mxu0 0.0
        %1207 = vmatpush1.msra.mxu0 0.0
        %1208 = vmatprep.subr.mxu0 0.0
        %1209 = vmatpush1.msra.mxu0 0.0
        %1210 = vmatprep.subr.mxu0 0.0
        %1211 = vmatpush1.msra.mxu0 0.0
        %1212 = vmatprep.mubr.f32.mxu0 0.0
        %1213 = vmatmul.mubr.f32.gmra.mrb[0].mxu0 %v1143
        %v1214 = vpop.f32.mrb[0].mxu0
        %v1215 = vadd.f32 0.0, %v1214
        %v1216 = vpop.f32.mrb[0].mxu0
        %1217 = vmatprep.mubr.f32.mxu0 0.0
        %1218 = vmatmul.mubr.f32.gmra.mrb[0].mxu0 %v1146
        %v1219 = vpop.f32.mrb[0].mxu0
        %v1220 = vadd.f32 0.0, %v1219
        %v1221 = vpop.f32.mrb[0].mxu0
        %1222 = vdwg.mxu0
        %v1223 = vmul.f32 %v1215, 0.25
        %v1224 = vmul.f32 %v1220, 0.25
        %1226 = vset.pattern.permute.xlu0 0
        %1227 = vperm.xlu0 %1226, %v225
        %v1228 = vpop.permute.xlu0 %1227
        %v1229 = vrot.slane %v225, 2
        %v1230 = vrot.slane %v1228, 3
        %v1232 = vsel %vm748, %v1229, 0
        %v1235 = vsel %vm748, %v1223, 0
        %v1238 = vsel %vm748, %v1224, 0
        %1240 = vmatprep.subr.mxu0 0.0
        %1241 = vmatpush1.xpose.msra.mxu0 %v1235
        %1242 = vmatprep.subr.mxu0 0.0
        %1243 = vmatpush1.xpose.msra.mxu0 %v1238
        %1244 = vmatprep.subr.mxu0 0.0
        %1245 = vmatpush1.xpose.msra.mxu0 0.0
        %1246 = vmatprep.subr.mxu0 0.0
        %1247 = vmatpush1.xpose.msra.mxu0 0.0
        %1248 = vmatprep.subr.mxu0 0.0
        %1249 = vmatpush1.xpose.msra.mxu0 0.0
        %1250 = vmatprep.subr.mxu0 0.0
        %1251 = vmatpush1.xpose.msra.mxu0 0.0
        %1252 = vmatprep.subr.mxu0 0.0
        %1253 = vmatpush1.xpose.msra.mxu0 0.0
        %1254 = vmatprep.subr.mxu0 0.0
        %1255 = vmatpush1.xpose.msra.mxu0 0.0
        %1256 = vmatprep.subr.mxu0 0.0
        %1257 = vmatpush1.xpose.msra.mxu0 0.0
        %1258 = vmatprep.subr.mxu0 0.0
        %1259 = vmatpush1.xpose.msra.mxu0 0.0
        %1260 = vmatprep.subr.mxu0 0.0
        %1261 = vmatpush1.xpose.msra.mxu0 0.0
        %1262 = vmatprep.subr.mxu0 0.0
        %1263 = vmatpush1.xpose.msra.mxu0 0.0
        %1264 = vmatprep.subr.mxu0 0.0
        %1265 = vmatpush1.xpose.msra.mxu0 0.0
        %1266 = vmatprep.subr.mxu0 0.0
        %1267 = vmatpush1.xpose.msra.mxu0 0.0
        %1268 = vmatprep.subr.mxu0 0.0
        %1269 = vmatpush1.xpose.msra.mxu0 0.0
        %1270 = vmatprep.subr.mxu0 0.0
        %1271 = vmatpush1.xpose.msra.mxu0 0.0
        %1272 = vmatprep.subr.mxu0 0.0
        %1273 = vmatpush1.xpose.msra.mxu0 0.0
        %1274 = vmatprep.subr.mxu0 0.0
        %1275 = vmatpush1.xpose.msra.mxu0 0.0
        %1276 = vmatprep.subr.mxu0 0.0
        %1277 = vmatpush1.xpose.msra.mxu0 0.0
        %1278 = vmatprep.subr.mxu0 0.0
        %1279 = vmatpush1.xpose.msra.mxu0 0.0
        %1280 = vmatprep.subr.mxu0 0.0
        %1281 = vmatpush1.xpose.msra.mxu0 0.0
        %1282 = vmatprep.subr.mxu0 0.0
        %1283 = vmatpush1.xpose.msra.mxu0 0.0
        %1284 = vmatprep.subr.mxu0 0.0
        %1285 = vmatpush1.xpose.msra.mxu0 0.0
        %1286 = vmatprep.subr.mxu0 0.0
        %1287 = vmatpush1.xpose.msra.mxu0 0.0
        %1288 = vmatprep.subr.mxu0 0.0
        %1289 = vmatpush1.xpose.msra.mxu0 0.0
        %1290 = vmatprep.subr.mxu0 0.0
        %1291 = vmatpush1.xpose.msra.mxu0 0.0
        %1292 = vmatprep.subr.mxu0 0.0
        %1293 = vmatpush1.xpose.msra.mxu0 0.0
        %1294 = vmatprep.subr.mxu0 0.0
        %1295 = vmatpush1.xpose.msra.mxu0 0.0
        %1296 = vmatprep.subr.mxu0 0.0
        %1297 = vmatpush1.xpose.msra.mxu0 0.0
        %1298 = vmatprep.subr.mxu0 0.0
        %1299 = vmatpush1.xpose.msra.mxu0 0.0
        %1300 = vmatprep.subr.mxu0 0.0
        %1301 = vmatpush1.xpose.msra.mxu0 0.0
        %1302 = vmatprep.subr.mxu0 0.0
        %1303 = vmatpush1.xpose.msra.mxu0 0.0
        %1304 = vmatprep.mubr.f32.mxu0 0.0
        %1305 = vmatmul.mubr.f32.gmra.mrb[0].mxu0 %v1232
        %v1306 = vpop.f32.mrb[0].mxu0
        %v1307 = vadd.f32 %v1230, %v1306
        %v1308 = vpop.f32.mrb[0].mxu0
        %1309 = vdwg.mxu0
        %vm1310 = vcmask 122880
        %1311 = vst.msk [vmem:[%s204] sm:$0x1] %vm1310, %v1307
        %s1312 = sand.u32 %s120, 1
        %s1313 = scalar_lea.sflag [#allocation3], %s1312
        %s1314 = sand.u32 %s120, 1
        %s1315 = scalar_lea.vmem [#allocation2], %s1314
        // Predicated region
        $region37: #{tpu_custom_call.1} parent=35 // pred_check
          %p1316 = pneg %p130
        $region38: #{tpu_custom_call.1} parent=35 // pred_check_branch
          %1318 = sbr.rel (%p1316) target = $region40
        $region39: #{tpu_custom_call.1} parent=35 // pred_region
          %s1320 = ssub.s32 16, 16
          %1321 = vsyncadd %s1313, %s1320
          %s1322 = smul.addr %s18, 16
          %s1323 = scalar_lea.hbm %s4, %s1322
          %s1325 = sshll.u32 %s1315, 4
          %s1326 = int_to_ptr.vmem [resolvable:$true] %s1325
          %1328 = dma.vmem_to_hbm [thread:$0]  %s1326, 16, %s1323, %s1313
        $region40: #{tpu_custom_call.1} parent=35 // pred_fallthru
          _
      $region36: #{tpu_custom_call.1} parent=5 // pred_fallthru
        _
      %p1329 = scmp.le.s32.totalorder 2, %s13
      // Predicated region
      $region41: #{tpu_custom_call.1} parent=5 // pred_check
        %p1330 = pneg %p1329
      $region42: #{tpu_custom_call.1} parent=5 // pred_check_branch
        %1332 = sbr.rel (%p1330) target = $region44
      $region43: #{tpu_custom_call.1} parent=5 // pred_region
        %s1333 = ssub.s32 %s13, 2
        // Predicated region
        $region45: #{tpu_custom_call.1} parent=43 // pred_check
          %p1334 = pneg %p136
        $region46: #{tpu_custom_call.1} parent=43 // pred_check_branch
          %1336 = sbr.rel (%p1334) target = $region48
        $region47: #{tpu_custom_call.1} parent=43 // pred_region
          %s1337 = sand.u32 %s121, 1
          %s1338 = scalar_lea.sflag [#allocation3], %s1337
          %s1339 = sand.u32 %s121, 1
          %s1340 = scalar_lea.vmem [#allocation2], %s1339
          %1341 = dma.done %s1338, 16
        $region48: #{tpu_custom_call.1} parent=43 // pred_fallthru
          _
      $region44: #{tpu_custom_call.1} parent=5 // pred_fallthru
        _
    $region6: #{tpu_custom_call.1} parent=1 // loop_footer
      %s17 = sadd.s32 1, %s13
    $region7: #{tpu_custom_call.1} parent=1 // loop_footer_branch
      %12 = sbr.rel target = $region3
    $region8: #{tpu_custom_call.1} parent=1 // loop_exit
      _
    %1342 = vsyncpa [#allocation3], 1
    %s1343 = scalar_lea.sflag [#allocation3], 1
    %1344 = vsyncpa %s1343, 1

</llo_original>
